<compile_context>
chip_gen: v7x
topology: tpu7x:2x2x1
jax: 0.10.0
libtpu: 0.0.40
codegen_flags: <defaults>
</compile_context>

<pallas_src>
import functools

import jax
import jax.numpy as jnp
from jax.experimental import pallas as pl
from jax.experimental.pallas import tpu as pltpu

_BN_EPS = 1e-5


# ----------------------------------------------------------------------------
# Shared per-layer math
# ----------------------------------------------------------------------------
def _layer_step(x, w_bf16, gamma_row, beta_row):
    """One [Linear -> BatchNorm1d(train) -> ReLU] layer on an f32 activation x."""
    # Linear (no bias): bf16 x bf16 on the MXU, f32 accumulation.
    y = jnp.dot(x.astype(jnp.bfloat16), w_bf16, preferred_element_type=jnp.float32)
    # BatchNorm1d training-mode stats (biased variance), one pass, f32.
    inv_b = 1.0 / y.shape[0]
    mean = jnp.sum(y, axis=0, keepdims=True) * inv_b             # (1, N)
    ex2 = jnp.sum(y * y, axis=0, keepdims=True) * inv_b          # (1, N)
    # Clamp: one-pass variance can cancel slightly negative in f32.
    var = jnp.maximum(ex2 - mean * mean, 0.0)
    scale = gamma_row * jax.lax.rsqrt(var + _BN_EPS)             # (1, N)
    shift = beta_row - mean * scale                              # (1, N)
    # Affine + ReLU as a single FMA + max.
    return jnp.maximum(y * scale + shift, 0.0)


# ----------------------------------------------------------------------------
# Fused path: whole (L, N, N) weight stack VMEM-resident, one grid step.
# ----------------------------------------------------------------------------
def _fused_mlp_kernel(x_ref, w_ref, gamma_ref, beta_ref, out_ref, *, unroll):
    num_layers = w_ref.shape[0]

    def body(l, x):
        w = w_ref[l]                       # (N, N) bf16
        g = gamma_ref[pl.ds(l, 1), :]      # (1, N) f32
        b = beta_ref[pl.ds(l, 1), :]       # (1, N) f32
        return _layer_step(x, w, g, b)

    x0 = x_ref[...].astype(jnp.float32)
    out_ref[...] = jax.lax.fori_loop(0, num_layers, body, x0, unroll=unroll)


def _mlp_forward_fused(x, w_t, gamma, beta, vmem_limit_bytes):
    B, N = x.shape
    L = w_t.shape[0]
    vmem_spec = pl.BlockSpec(memory_space=pltpu.MemorySpace.VMEM)
    # Full unroll for small L; partial unroll (8) for the module-default L=100
    # so the scheduler still sees the body without code/vreg blow-up.
    unroll = L if L <= 16 else 8
    kernel = functools.partial(_fused_mlp_kernel, unroll=unroll)
    return pl.pallas_call(
        kernel,
        out_shape=jax.ShapeDtypeStruct((B, N), jnp.float32),
        in_specs=[vmem_spec, vmem_spec, vmem_spec, vmem_spec],
        out_specs=vmem_spec,
        compiler_params=pltpu.CompilerParams(
            vmem_limit_bytes=int(vmem_limit_bytes),
        ),
    )(x, w_t, gamma, beta)


# ----------------------------------------------------------------------------
# Chunked path: grid over layer chunks; weight chunk double-buffered by
# BlockSpec, activation resident in the output block, gamma/beta VMEM-resident.
# ----------------------------------------------------------------------------
def _chunked_mlp_kernel(x_ref, gamma_ref, beta_ref, w_ref, out_ref, *,
                        layers_per_chunk, unroll):
    chunk = pl.program_id(0)

    @pl.when(chunk == 0)
    def _():
        out_ref[...] = x_ref[...]          # seed the resident activation

    base = chunk * layers_per_chunk

    def body(l, x):
        w = w_ref[l]                              # (N, N) bf16 (current chunk)
        g = gamma_ref[pl.ds(base + l, 1), :]      # (1, N) f32 (resident)
        b = beta_ref[pl.ds(base + l, 1), :]       # (1, N) f32 (resident)
        return _layer_step(x, w, g, b)

    x = out_ref[...]                              # (B, N) f32 resident carry
    out_ref[...] = jax.lax.fori_loop(0, layers_per_chunk, body, x, unroll=unroll)


def _largest_divisor_at_most(n, cap):
    cap = max(1, min(int(n), int(cap)))
    for d in range(cap, 0, -1):
        if n % d == 0:
            return d
    return 1


def _mlp_forward_chunked(x, w_t, gamma, beta, fused_budget_bytes,
                         vmem_limit_bytes, layers_per_chunk=None):
    B, N = x.shape
    L = w_t.shape[0]

    per_layer_w_bytes = N * N * w_t.dtype.itemsize
    resident_bytes = 2 * L * N * 4 + 8 * B * N * 4 + (1 << 20)
    avail = max(int(fused_budget_bytes) - resident_bytes, 2 * per_layer_w_bytes)
    # 2x: BlockSpec double-buffers the next chunk behind the current compute.
    max_chunk = max(1, avail // (2 * per_layer_w_bytes))
    cap = min(max_chunk, 32)
    if layers_per_chunk is not None:
        cap = min(cap, int(layers_per_chunk))
    lb = _largest_divisor_at_most(L, cap)
    num_chunks = L // lb

    kernel = functools.partial(_chunked_mlp_kernel,
                               layers_per_chunk=lb,
                               unroll=min(lb, 4))
    return pl.pallas_call(
        kernel,
        out_shape=jax.ShapeDtypeStruct((B, N), jnp.float32),
        grid_spec=pltpu.PrefetchScalarGridSpec(
            num_scalar_prefetch=0,
            grid=(num_chunks,),
            in_specs=[
                pl.BlockSpec((B, N), lambda c: (0, 0)),        # x (used at chunk 0)
                pl.BlockSpec((L, N), lambda c: (0, 0)),        # gamma, resident (1 DMA)
                pl.BlockSpec((L, N), lambda c: (0, 0)),        # beta,  resident (1 DMA)
                pl.BlockSpec((lb, N, N), lambda c: (c, 0, 0)),  # bf16 weight chunk
            ],
            out_specs=pl.BlockSpec((B, N), lambda c: (0, 0)),  # resident activation
        ),
        compiler_params=pltpu.CompilerParams(
            dimension_semantics=("arbitrary",),   # sequential layer dependence
            vmem_limit_bytes=int(vmem_limit_bytes),
        ),
    )(x, gamma, beta, w_t)


# ----------------------------------------------------------------------------
# Generation-aware VMEM budgets + dispatch
# ----------------------------------------------------------------------------
def _vmem_budgets():
    try:
        cap = int(pltpu.get_tpu_info().vmem_capacity_bytes)
    except Exception:
        cap = 64 * 1024 * 1024            # conservative fallback (v7x-sized)
    # Leave headroom for compiler-internal scratch and I/O double-buffering:
    #   v7x  (64 MiB)  -> limit ~48 MiB, fused budget ~41 MiB
    #   v5e/v6e (128 MiB) -> limit ~96 MiB, fused budget ~82 MiB
    vmem_limit = max(32 * 1024 * 1024,
                     min(int(cap * 0.75), cap - 16 * 1024 * 1024))
    fused_budget = int(vmem_limit * 0.85)
    return fused_budget, vmem_limit


def mlp_forward(x, w_t, gamma, beta, *, force_chunked=False, layers_per_chunk=None):
    """x: (B, N) f32; w_t: (L, N, N) bf16 pre-transposed weights; gamma/beta: (L, N) f32."""
    B, N = x.shape
    L = w_t.shape[0]
    fused_budget, vmem_limit = _vmem_budgets()
    est_bytes = (w_t.size * w_t.dtype.itemsize   # weight stack
                 + 2 * L * N * 4                 # gamma / beta
                 + 8 * B * N * 4                 # x, carry, y, y^2, output, rows
                 + (1 << 20))                    # compiler-internal scratch slack
    if force_chunked or est_bytes > fused_budget:
        return _mlp_forward_chunked(x, w_t, gamma, beta, fused_budget, vmem_limit,
                                    layers_per_chunk=layers_per_chunk)
    return _mlp_forward_fused(x, w_t, gamma, beta, vmem_limit)


# ----------------------------------------------------------------------------
# Plain-JAX reference (same bf16-weight / f32-accumulate precision choices)
# ----------------------------------------------------------------------------
def mlp_reference(x, w_t, gamma, beta):
    out = x
    for l in range(w_t.shape[0]):
        y = jnp.dot(out.astype(jnp.bfloat16), w_t[l], preferred_element_type=jnp.float32)
        mean = jnp.mean(y, axis=0, keepdims=True)
        var = jnp.mean((y - mean) ** 2, axis=0, keepdims=True)
        y = gamma[l][None, :] * (y - mean) * jax.lax.rsqrt(var + _BN_EPS) + beta[l][None, :]
        out = jnp.maximum(y, 0.0)
    return out


if __name__ == "__main__":
    B = 8        # batch (fills the 8 sublanes)
    N = 128      # neural_num -- lane-dense (multiple of 128)
    L = 8        # layers (module default is 100; kept small for the demo)

    key = jax.random.PRNGKey(0)
    kx, kw = jax.random.split(key)

    # Input ~ N(0, 1), as in the lesson script.
    x = jax.random.normal(kx, (B, N), dtype=jnp.float32)

    # Kaiming-normal init for each Linear weight: std = sqrt(2 / fan_in).
    # PyTorch weight is (out, in); we store the transposed (in, out) form, in bf16.
    kaiming_std = jnp.sqrt(2.0 / N)
    w_t = (jax.random.normal(kw, (L, N, N), dtype=jnp.float32) * kaiming_std
           ).astype(jnp.bfloat16)

    # BatchNorm1d affine params: gamma = 1, beta = 0.
    gamma = jnp.ones((L, N), dtype=jnp.float32)
    beta = jnp.zeros((L, N), dtype=jnp.float32)

    ref = mlp_reference(x, w_t, gamma, beta)

    # Fused path (single grid step, VMEM-resident weight stack) -- the demo size.
    out_fused = jax.block_until_ready(mlp_forward(x, w_t, gamma, beta))
    assert out_fused.shape == (B, N)
    assert jnp.allclose(out_fused, ref, atol=1e-3, rtol=1e-3), "fused path mismatch"

    # Layer-chunked streaming path (used when the weight stack exceeds the fused
    # VMEM budget); force a small chunk here to exercise the multi-chunk grid.
    out_chunked = jax.block_until_ready(
        mlp_forward(x, w_t, gamma, beta, force_chunked=True, layers_per_chunk=2))
    assert jnp.allclose(out_chunked, ref, atol=1e-3, rtol=1e-3), "chunked path mismatch"

    # TODO(synk): per-layer std printing / NaN early-exit in the PyTorch forward is
    # host-side debug logging and is not reproduced in the kernel.
    print("KERNEL_OK")
</pallas_src>

<mosaic_0001>
module attributes {stable_mosaic.version = 11 : i64} {
  func.func @_fused_mlp_kernel(%arg0: memref<8x128xf32, #tpu.memory_space<vmem>>, %arg1: memref<8x128x128xbf16, #tpu.memory_space<vmem>>, %arg2: memref<8x128xf32, #tpu.memory_space<vmem>>, %arg3: memref<8x128xf32, #tpu.memory_space<vmem>>, %arg4: memref<8x128xf32, #tpu.memory_space<vmem>>) attributes {dimension_semantics = [], scalar_prefetch = 0 : i64, scratch_operands = 0 : i64, tpu.core_type = #tpu.core_type<tc>} {
    %c0 = arith.constant 0 : index
    %c0_0 = arith.constant 0 : index
    %0 = vector.load %arg0[%c0, %c0_0] : memref<8x128xf32, #tpu.memory_space<vmem>>, vector<8x128xf32>
    %c0_i32 = arith.constant 0 : i32
    %1 = arith.index_cast %c0_i32 : i32 to index
    %c0_1 = arith.constant 0 : index
    %c0_2 = arith.constant 0 : index
    %2 = vector.load %arg1[%1, %c0_1, %c0_2] : memref<8x128x128xbf16, #tpu.memory_space<vmem>>, vector<1x128x128xbf16>
    %3 = vector.shape_cast %2 : vector<1x128x128xbf16> to vector<128x128xbf16>
    %4 = arith.index_cast %c0_i32 : i32 to index
    %c0_3 = arith.constant 0 : index
    %5 = vector.load %arg2[%4, %c0_3] : memref<8x128xf32, #tpu.memory_space<vmem>>, vector<1x128xf32>
    %6 = arith.index_cast %c0_i32 : i32 to index
    %c0_4 = arith.constant 0 : index
    %7 = vector.load %arg3[%6, %c0_4] : memref<8x128xf32, #tpu.memory_space<vmem>>, vector<1x128xf32>
    %8 = arith.truncf %0 : vector<8x128xf32> to vector<8x128xbf16>
    %cst = arith.constant dense<0.000000e+00> : vector<8x128xf32>
    %9 = tpu.matmul %8, %3, %cst {dimension_numbers = #tpu.dot_dimension_numbers<[1], [0], [0], [1], [0, 0, 1, 1], [], []>} : vector<8x128xbf16>, vector<128x128xbf16>, vector<8x128xf32> -> vector<8x128xf32>
    %cst_5 = arith.constant dense<0.000000e+00> : vector<128xf32>
    %10 = vector.multi_reduction <add>, %9, %cst_5 [0] : vector<8x128xf32> to vector<128xf32>
    %11 = vector.shape_cast %10 : vector<128xf32> to vector<1x128xf32>
    %cst_6 = arith.constant 1.250000e-01 : f32
    %12 = vector.broadcast %cst_6 : f32 to vector<1x128xf32>
    %13 = arith.mulf %11, %12 : vector<1x128xf32>
    %14 = arith.mulf %9, %9 : vector<8x128xf32>
    %cst_7 = arith.constant dense<0.000000e+00> : vector<128xf32>
    %15 = vector.multi_reduction <add>, %14, %cst_7 [0] : vector<8x128xf32> to vector<128xf32>
    %16 = vector.shape_cast %15 : vector<128xf32> to vector<1x128xf32>
    %cst_8 = arith.constant 1.250000e-01 : f32
    %17 = vector.broadcast %cst_8 : f32 to vector<1x128xf32>
    %18 = arith.mulf %16, %17 : vector<1x128xf32>
    %19 = arith.mulf %13, %13 : vector<1x128xf32>
    %20 = arith.subf %18, %19 : vector<1x128xf32>
    %cst_9 = arith.constant 0.000000e+00 : f32
    %21 = vector.broadcast %cst_9 : f32 to vector<1x128xf32>
    %22 = arith.maximumf %20, %21 : vector<1x128xf32>
    %cst_10 = arith.constant 9.99999974E-6 : f32
    %23 = vector.broadcast %cst_10 : f32 to vector<1x128xf32>
    %24 = arith.addf %22, %23 : vector<1x128xf32>
    %25 = math.rsqrt %24 : vector<1x128xf32>
    %26 = arith.mulf %5, %25 : vector<1x128xf32>
    %27 = arith.mulf %13, %26 : vector<1x128xf32>
    %28 = arith.subf %7, %27 : vector<1x128xf32>
    %29 = vector.broadcast %26 : vector<1x128xf32> to vector<8x128xf32>
    %30 = arith.mulf %9, %29 : vector<8x128xf32>
    %31 = vector.broadcast %28 : vector<1x128xf32> to vector<8x128xf32>
    %32 = arith.addf %30, %31 : vector<8x128xf32>
    %cst_11 = arith.constant 0.000000e+00 : f32
    %33 = vector.broadcast %cst_11 : f32 to vector<8x128xf32>
    %34 = arith.maximumf %32, %33 : vector<8x128xf32>
    %c1_i32 = arith.constant 1 : i32
    %35 = arith.index_cast %c1_i32 : i32 to index
    %c0_12 = arith.constant 0 : index
    %c0_13 = arith.constant 0 : index
    %36 = vector.load %arg1[%35, %c0_12, %c0_13] : memref<8x128x128xbf16, #tpu.memory_space<vmem>>, vector<1x128x128xbf16>
    %37 = vector.shape_cast %36 : vector<1x128x128xbf16> to vector<128x128xbf16>
    %38 = arith.index_cast %c1_i32 : i32 to index
    %c0_14 = arith.constant 0 : index
    %39 = vector.load %arg2[%38, %c0_14] : memref<8x128xf32, #tpu.memory_space<vmem>>, vector<1x128xf32>
    %40 = arith.index_cast %c1_i32 : i32 to index
    %c0_15 = arith.constant 0 : index
    %41 = vector.load %arg3[%40, %c0_15] : memref<8x128xf32, #tpu.memory_space<vmem>>, vector<1x128xf32>
    %42 = arith.truncf %34 : vector<8x128xf32> to vector<8x128xbf16>
    %cst_16 = arith.constant dense<0.000000e+00> : vector<8x128xf32>
    %43 = tpu.matmul %42, %37, %cst_16 {dimension_numbers = #tpu.dot_dimension_numbers<[1], [0], [0], [1], [0, 0, 1, 1], [], []>} : vector<8x128xbf16>, vector<128x128xbf16>, vector<8x128xf32> -> vector<8x128xf32>
    %cst_17 = arith.constant dense<0.000000e+00> : vector<128xf32>
    %44 = vector.multi_reduction <add>, %43, %cst_17 [0] : vector<8x128xf32> to vector<128xf32>
    %45 = vector.shape_cast %44 : vector<128xf32> to vector<1x128xf32>
    %cst_18 = arith.constant 1.250000e-01 : f32
    %46 = vector.broadcast %cst_18 : f32 to vector<1x128xf32>
    %47 = arith.mulf %45, %46 : vector<1x128xf32>
    %48 = arith.mulf %43, %43 : vector<8x128xf32>
    %cst_19 = arith.constant dense<0.000000e+00> : vector<128xf32>
    %49 = vector.multi_reduction <add>, %48, %cst_19 [0] : vector<8x128xf32> to vector<128xf32>
    %50 = vector.shape_cast %49 : vector<128xf32> to vector<1x128xf32>
    %cst_20 = arith.constant 1.250000e-01 : f32
    %51 = vector.broadcast %cst_20 : f32 to vector<1x128xf32>
    %52 = arith.mulf %50, %51 : vector<1x128xf32>
    %53 = arith.mulf %47, %47 : vector<1x128xf32>
    %54 = arith.subf %52, %53 : vector<1x128xf32>
    %cst_21 = arith.constant 0.000000e+00 : f32
    %55 = vector.broadcast %cst_21 : f32 to vector<1x128xf32>
    %56 = arith.maximumf %54, %55 : vector<1x128xf32>
    %cst_22 = arith.constant 9.99999974E-6 : f32
    %57 = vector.broadcast %cst_22 : f32 to vector<1x128xf32>
    %58 = arith.addf %56, %57 : vector<1x128xf32>
    %59 = math.rsqrt %58 : vector<1x128xf32>
    %60 = arith.mulf %39, %59 : vector<1x128xf32>
    %61 = arith.mulf %47, %60 : vector<1x128xf32>
    %62 = arith.subf %41, %61 : vector<1x128xf32>
    %63 = vector.broadcast %60 : vector<1x128xf32> to vector<8x128xf32>
    %64 = arith.mulf %43, %63 : vector<8x128xf32>
    %65 = vector.broadcast %62 : vector<1x128xf32> to vector<8x128xf32>
    %66 = arith.addf %64, %65 : vector<8x128xf32>
    %cst_23 = arith.constant 0.000000e+00 : f32
    %67 = vector.broadcast %cst_23 : f32 to vector<8x128xf32>
    %68 = arith.maximumf %66, %67 : vector<8x128xf32>
    %c2_i32 = arith.constant 2 : i32
    %69 = arith.index_cast %c2_i32 : i32 to index
    %c0_24 = arith.constant 0 : index
    %c0_25 = arith.constant 0 : index
    %70 = vector.load %arg1[%69, %c0_24, %c0_25] : memref<8x128x128xbf16, #tpu.memory_space<vmem>>, vector<1x128x128xbf16>
    %71 = vector.shape_cast %70 : vector<1x128x128xbf16> to vector<128x128xbf16>
    %72 = arith.index_cast %c2_i32 : i32 to index
    %c0_26 = arith.constant 0 : index
    %73 = vector.load %arg2[%72, %c0_26] : memref<8x128xf32, #tpu.memory_space<vmem>>, vector<1x128xf32>
    %74 = arith.index_cast %c2_i32 : i32 to index
    %c0_27 = arith.constant 0 : index
    %75 = vector.load %arg3[%74, %c0_27] : memref<8x128xf32, #tpu.memory_space<vmem>>, vector<1x128xf32>
    %76 = arith.truncf %68 : vector<8x128xf32> to vector<8x128xbf16>
    %cst_28 = arith.constant dense<0.000000e+00> : vector<8x128xf32>
    %77 = tpu.matmul %76, %71, %cst_28 {dimension_numbers = #tpu.dot_dimension_numbers<[1], [0], [0], [1], [0, 0, 1, 1], [], []>} : vector<8x128xbf16>, vector<128x128xbf16>, vector<8x128xf32> -> vector<8x128xf32>
    %cst_29 = arith.constant dense<0.000000e+00> : vector<128xf32>
    %78 = vector.multi_reduction <add>, %77, %cst_29 [0] : vector<8x128xf32> to vector<128xf32>
    %79 = vector.shape_cast %78 : vector<128xf32> to vector<1x128xf32>
    %cst_30 = arith.constant 1.250000e-01 : f32
    %80 = vector.broadcast %cst_30 : f32 to vector<1x128xf32>
    %81 = arith.mulf %79, %80 : vector<1x128xf32>
    %82 = arith.mulf %77, %77 : vector<8x128xf32>
    %cst_31 = arith.constant dense<0.000000e+00> : vector<128xf32>
    %83 = vector.multi_reduction <add>, %82, %cst_31 [0] : vector<8x128xf32> to vector<128xf32>
    %84 = vector.shape_cast %83 : vector<128xf32> to vector<1x128xf32>
    %cst_32 = arith.constant 1.250000e-01 : f32
    %85 = vector.broadcast %cst_32 : f32 to vector<1x128xf32>
    %86 = arith.mulf %84, %85 : vector<1x128xf32>
    %87 = arith.mulf %81, %81 : vector<1x128xf32>
    %88 = arith.subf %86, %87 : vector<1x128xf32>
    %cst_33 = arith.constant 0.000000e+00 : f32
    %89 = vector.broadcast %cst_33 : f32 to vector<1x128xf32>
    %90 = arith.maximumf %88, %89 : vector<1x128xf32>
    %cst_34 = arith.constant 9.99999974E-6 : f32
    %91 = vector.broadcast %cst_34 : f32 to vector<1x128xf32>
    %92 = arith.addf %90, %91 : vector<1x128xf32>
    %93 = math.rsqrt %92 : vector<1x128xf32>
    %94 = arith.mulf %73, %93 : vector<1x128xf32>
    %95 = arith.mulf %81, %94 : vector<1x128xf32>
    %96 = arith.subf %75, %95 : vector<1x128xf32>
    %97 = vector.broadcast %94 : vector<1x128xf32> to vector<8x128xf32>
    %98 = arith.mulf %77, %97 : vector<8x128xf32>
    %99 = vector.broadcast %96 : vector<1x128xf32> to vector<8x128xf32>
    %100 = arith.addf %98, %99 : vector<8x128xf32>
    %cst_35 = arith.constant 0.000000e+00 : f32
    %101 = vector.broadcast %cst_35 : f32 to vector<8x128xf32>
    %102 = arith.maximumf %100, %101 : vector<8x128xf32>
    %c3_i32 = arith.constant 3 : i32
    %103 = arith.index_cast %c3_i32 : i32 to index
    %c0_36 = arith.constant 0 : index
    %c0_37 = arith.constant 0 : index
    %104 = vector.load %arg1[%103, %c0_36, %c0_37] : memref<8x128x128xbf16, #tpu.memory_space<vmem>>, vector<1x128x128xbf16>
    %105 = vector.shape_cast %104 : vector<1x128x128xbf16> to vector<128x128xbf16>
    %106 = arith.index_cast %c3_i32 : i32 to index
    %c0_38 = arith.constant 0 : index
    %107 = vector.load %arg2[%106, %c0_38] : memref<8x128xf32, #tpu.memory_space<vmem>>, vector<1x128xf32>
    %108 = arith.index_cast %c3_i32 : i32 to index
    %c0_39 = arith.constant 0 : index
    %109 = vector.load %arg3[%108, %c0_39] : memref<8x128xf32, #tpu.memory_space<vmem>>, vector<1x128xf32>
    %110 = arith.truncf %102 : vector<8x128xf32> to vector<8x128xbf16>
    %cst_40 = arith.constant dense<0.000000e+00> : vector<8x128xf32>
    %111 = tpu.matmul %110, %105, %cst_40 {dimension_numbers = #tpu.dot_dimension_numbers<[1], [0], [0], [1], [0, 0, 1, 1], [], []>} : vector<8x128xbf16>, vector<128x128xbf16>, vector<8x128xf32> -> vector<8x128xf32>
    %cst_41 = arith.constant dense<0.000000e+00> : vector<128xf32>
    %112 = vector.multi_reduction <add>, %111, %cst_41 [0] : vector<8x128xf32> to vector<128xf32>
    %113 = vector.shape_cast %112 : vector<128xf32> to vector<1x128xf32>
    %cst_42 = arith.constant 1.250000e-01 : f32
    %114 = vector.broadcast %cst_42 : f32 to vector<1x128xf32>
    %115 = arith.mulf %113, %114 : vector<1x128xf32>
    %116 = arith.mulf %111, %111 : vector<8x128xf32>
    %cst_43 = arith.constant dense<0.000000e+00> : vector<128xf32>
    %117 = vector.multi_reduction <add>, %116, %cst_43 [0] : vector<8x128xf32> to vector<128xf32>
    %118 = vector.shape_cast %117 : vector<128xf32> to vector<1x128xf32>
    %cst_44 = arith.constant 1.250000e-01 : f32
    %119 = vector.broadcast %cst_44 : f32 to vector<1x128xf32>
    %120 = arith.mulf %118, %119 : vector<1x128xf32>
    %121 = arith.mulf %115, %115 : vector<1x128xf32>
    %122 = arith.subf %120, %121 : vector<1x128xf32>
    %cst_45 = arith.constant 0.000000e+00 : f32
    %123 = vector.broadcast %cst_45 : f32 to vector<1x128xf32>
    %124 = arith.maximumf %122, %123 : vector<1x128xf32>
    %cst_46 = arith.constant 9.99999974E-6 : f32
    %125 = vector.broadcast %cst_46 : f32 to vector<1x128xf32>
    %126 = arith.addf %124, %125 : vector<1x128xf32>
    %127 = math.rsqrt %126 : vector<1x128xf32>
    %128 = arith.mulf %107, %127 : vector<1x128xf32>
    %129 = arith.mulf %115, %128 : vector<1x128xf32>
    %130 = arith.subf %109, %129 : vector<1x128xf32>
    %131 = vector.broadcast %128 : vector<1x128xf32> to vector<8x128xf32>
    %132 = arith.mulf %111, %131 : vector<8x128xf32>
    %133 = vector.broadcast %130 : vector<1x128xf32> to vector<8x128xf32>
    %134 = arith.addf %132, %133 : vector<8x128xf32>
    %cst_47 = arith.constant 0.000000e+00 : f32
    %135 = vector.broadcast %cst_47 : f32 to vector<8x128xf32>
    %136 = arith.maximumf %134, %135 : vector<8x128xf32>
    %c4_i32 = arith.constant 4 : i32
    %137 = arith.index_cast %c4_i32 : i32 to index
    %c0_48 = arith.constant 0 : index
    %c0_49 = arith.constant 0 : index
    %138 = vector.load %arg1[%137, %c0_48, %c0_49] : memref<8x128x128xbf16, #tpu.memory_space<vmem>>, vector<1x128x128xbf16>
    %139 = vector.shape_cast %138 : vector<1x128x128xbf16> to vector<128x128xbf16>
    %140 = arith.index_cast %c4_i32 : i32 to index
    %c0_50 = arith.constant 0 : index
    %141 = vector.load %arg2[%140, %c0_50] : memref<8x128xf32, #tpu.memory_space<vmem>>, vector<1x128xf32>
    %142 = arith.index_cast %c4_i32 : i32 to index
    %c0_51 = arith.constant 0 : index
    %143 = vector.load %arg3[%142, %c0_51] : memref<8x128xf32, #tpu.memory_space<vmem>>, vector<1x128xf32>
    %144 = arith.truncf %136 : vector<8x128xf32> to vector<8x128xbf16>
    %cst_52 = arith.constant dense<0.000000e+00> : vector<8x128xf32>
    %145 = tpu.matmul %144, %139, %cst_52 {dimension_numbers = #tpu.dot_dimension_numbers<[1], [0], [0], [1], [0, 0, 1, 1], [], []>} : vector<8x128xbf16>, vector<128x128xbf16>, vector<8x128xf32> -> vector<8x128xf32>
    %cst_53 = arith.constant dense<0.000000e+00> : vector<128xf32>
    %146 = vector.multi_reduction <add>, %145, %cst_53 [0] : vector<8x128xf32> to vector<128xf32>
    %147 = vector.shape_cast %146 : vector<128xf32> to vector<1x128xf32>
    %cst_54 = arith.constant 1.250000e-01 : f32
    %148 = vector.broadcast %cst_54 : f32 to vector<1x128xf32>
    %149 = arith.mulf %147, %148 : vector<1x128xf32>
    %150 = arith.mulf %145, %145 : vector<8x128xf32>
    %cst_55 = arith.constant dense<0.000000e+00> : vector<128xf32>
    %151 = vector.multi_reduction <add>, %150, %cst_55 [0] : vector<8x128xf32> to vector<128xf32>
    %152 = vector.shape_cast %151 : vector<128xf32> to vector<1x128xf32>
    %cst_56 = arith.constant 1.250000e-01 : f32
    %153 = vector.broadcast %cst_56 : f32 to vector<1x128xf32>
    %154 = arith.mulf %152, %153 : vector<1x128xf32>
    %155 = arith.mulf %149, %149 : vector<1x128xf32>
    %156 = arith.subf %154, %155 : vector<1x128xf32>
    %cst_57 = arith.constant 0.000000e+00 : f32
    %157 = vector.broadcast %cst_57 : f32 to vector<1x128xf32>
    %158 = arith.maximumf %156, %157 : vector<1x128xf32>
    %cst_58 = arith.constant 9.99999974E-6 : f32
    %159 = vector.broadcast %cst_58 : f32 to vector<1x128xf32>
    %160 = arith.addf %158, %159 : vector<1x128xf32>
    %161 = math.rsqrt %160 : vector<1x128xf32>
    %162 = arith.mulf %141, %161 : vector<1x128xf32>
    %163 = arith.mulf %149, %162 : vector<1x128xf32>
    %164 = arith.subf %143, %163 : vector<1x128xf32>
    %165 = vector.broadcast %162 : vector<1x128xf32> to vector<8x128xf32>
    %166 = arith.mulf %145, %165 : vector<8x128xf32>
    %167 = vector.broadcast %164 : vector<1x128xf32> to vector<8x128xf32>
    %168 = arith.addf %166, %167 : vector<8x128xf32>
    %cst_59 = arith.constant 0.000000e+00 : f32
    %169 = vector.broadcast %cst_59 : f32 to vector<8x128xf32>
    %170 = arith.maximumf %168, %169 : vector<8x128xf32>
    %c5_i32 = arith.constant 5 : i32
    %171 = arith.index_cast %c5_i32 : i32 to index
    %c0_60 = arith.constant 0 : index
    %c0_61 = arith.constant 0 : index
    %172 = vector.load %arg1[%171, %c0_60, %c0_61] : memref<8x128x128xbf16, #tpu.memory_space<vmem>>, vector<1x128x128xbf16>
    %173 = vector.shape_cast %172 : vector<1x128x128xbf16> to vector<128x128xbf16>
    %174 = arith.index_cast %c5_i32 : i32 to index
    %c0_62 = arith.constant 0 : index
    %175 = vector.load %arg2[%174, %c0_62] : memref<8x128xf32, #tpu.memory_space<vmem>>, vector<1x128xf32>
    %176 = arith.index_cast %c5_i32 : i32 to index
    %c0_63 = arith.constant 0 : index
    %177 = vector.load %arg3[%176, %c0_63] : memref<8x128xf32, #tpu.memory_space<vmem>>, vector<1x128xf32>
    %178 = arith.truncf %170 : vector<8x128xf32> to vector<8x128xbf16>
    %cst_64 = arith.constant dense<0.000000e+00> : vector<8x128xf32>
    %179 = tpu.matmul %178, %173, %cst_64 {dimension_numbers = #tpu.dot_dimension_numbers<[1], [0], [0], [1], [0, 0, 1, 1], [], []>} : vector<8x128xbf16>, vector<128x128xbf16>, vector<8x128xf32> -> vector<8x128xf32>
    %cst_65 = arith.constant dense<0.000000e+00> : vector<128xf32>
    %180 = vector.multi_reduction <add>, %179, %cst_65 [0] : vector<8x128xf32> to vector<128xf32>
    %181 = vector.shape_cast %180 : vector<128xf32> to vector<1x128xf32>
    %cst_66 = arith.constant 1.250000e-01 : f32
    %182 = vector.broadcast %cst_66 : f32 to vector<1x128xf32>
    %183 = arith.mulf %181, %182 : vector<1x128xf32>
    %184 = arith.mulf %179, %179 : vector<8x128xf32>
    %cst_67 = arith.constant dense<0.000000e+00> : vector<128xf32>
    %185 = vector.multi_reduction <add>, %184, %cst_67 [0] : vector<8x128xf32> to vector<128xf32>
    %186 = vector.shape_cast %185 : vector<128xf32> to vector<1x128xf32>
    %cst_68 = arith.constant 1.250000e-01 : f32
    %187 = vector.broadcast %cst_68 : f32 to vector<1x128xf32>
    %188 = arith.mulf %186, %187 : vector<1x128xf32>
    %189 = arith.mulf %183, %183 : vector<1x128xf32>
    %190 = arith.subf %188, %189 : vector<1x128xf32>
    %cst_69 = arith.constant 0.000000e+00 : f32
    %191 = vector.broadcast %cst_69 : f32 to vector<1x128xf32>
    %192 = arith.maximumf %190, %191 : vector<1x128xf32>
    %cst_70 = arith.constant 9.99999974E-6 : f32
    %193 = vector.broadcast %cst_70 : f32 to vector<1x128xf32>
    %194 = arith.addf %192, %193 : vector<1x128xf32>
    %195 = math.rsqrt %194 : vector<1x128xf32>
    %196 = arith.mulf %175, %195 : vector<1x128xf32>
    %197 = arith.mulf %183, %196 : vector<1x128xf32>
    %198 = arith.subf %177, %197 : vector<1x128xf32>
    %199 = vector.broadcast %196 : vector<1x128xf32> to vector<8x128xf32>
    %200 = arith.mulf %179, %199 : vector<8x128xf32>
    %201 = vector.broadcast %198 : vector<1x128xf32> to vector<8x128xf32>
    %202 = arith.addf %200, %201 : vector<8x128xf32>
    %cst_71 = arith.constant 0.000000e+00 : f32
    %203 = vector.broadcast %cst_71 : f32 to vector<8x128xf32>
    %204 = arith.maximumf %202, %203 : vector<8x128xf32>
    %c6_i32 = arith.constant 6 : i32
    %205 = arith.index_cast %c6_i32 : i32 to index
    %c0_72 = arith.constant 0 : index
    %c0_73 = arith.constant 0 : index
    %206 = vector.load %arg1[%205, %c0_72, %c0_73] : memref<8x128x128xbf16, #tpu.memory_space<vmem>>, vector<1x128x128xbf16>
    %207 = vector.shape_cast %206 : vector<1x128x128xbf16> to vector<128x128xbf16>
    %208 = arith.index_cast %c6_i32 : i32 to index
    %c0_74 = arith.constant 0 : index
    %209 = vector.load %arg2[%208, %c0_74] : memref<8x128xf32, #tpu.memory_space<vmem>>, vector<1x128xf32>
    %210 = arith.index_cast %c6_i32 : i32 to index
    %c0_75 = arith.constant 0 : index
    %211 = vector.load %arg3[%210, %c0_75] : memref<8x128xf32, #tpu.memory_space<vmem>>, vector<1x128xf32>
    %212 = arith.truncf %204 : vector<8x128xf32> to vector<8x128xbf16>
    %cst_76 = arith.constant dense<0.000000e+00> : vector<8x128xf32>
    %213 = tpu.matmul %212, %207, %cst_76 {dimension_numbers = #tpu.dot_dimension_numbers<[1], [0], [0], [1], [0, 0, 1, 1], [], []>} : vector<8x128xbf16>, vector<128x128xbf16>, vector<8x128xf32> -> vector<8x128xf32>
    %cst_77 = arith.constant dense<0.000000e+00> : vector<128xf32>
    %214 = vector.multi_reduction <add>, %213, %cst_77 [0] : vector<8x128xf32> to vector<128xf32>
    %215 = vector.shape_cast %214 : vector<128xf32> to vector<1x128xf32>
    %cst_78 = arith.constant 1.250000e-01 : f32
    %216 = vector.broadcast %cst_78 : f32 to vector<1x128xf32>
    %217 = arith.mulf %215, %216 : vector<1x128xf32>
    %218 = arith.mulf %213, %213 : vector<8x128xf32>
    %cst_79 = arith.constant dense<0.000000e+00> : vector<128xf32>
    %219 = vector.multi_reduction <add>, %218, %cst_79 [0] : vector<8x128xf32> to vector<128xf32>
    %220 = vector.shape_cast %219 : vector<128xf32> to vector<1x128xf32>
    %cst_80 = arith.constant 1.250000e-01 : f32
    %221 = vector.broadcast %cst_80 : f32 to vector<1x128xf32>
    %222 = arith.mulf %220, %221 : vector<1x128xf32>
    %223 = arith.mulf %217, %217 : vector<1x128xf32>
    %224 = arith.subf %222, %223 : vector<1x128xf32>
    %cst_81 = arith.constant 0.000000e+00 : f32
    %225 = vector.broadcast %cst_81 : f32 to vector<1x128xf32>
    %226 = arith.maximumf %224, %225 : vector<1x128xf32>
    %cst_82 = arith.constant 9.99999974E-6 : f32
    %227 = vector.broadcast %cst_82 : f32 to vector<1x128xf32>
    %228 = arith.addf %226, %227 : vector<1x128xf32>
    %229 = math.rsqrt %228 : vector<1x128xf32>
    %230 = arith.mulf %209, %229 : vector<1x128xf32>
    %231 = arith.mulf %217, %230 : vector<1x128xf32>
    %232 = arith.subf %211, %231 : vector<1x128xf32>
    %233 = vector.broadcast %230 : vector<1x128xf32> to vector<8x128xf32>
    %234 = arith.mulf %213, %233 : vector<8x128xf32>
    %235 = vector.broadcast %232 : vector<1x128xf32> to vector<8x128xf32>
    %236 = arith.addf %234, %235 : vector<8x128xf32>
    %cst_83 = arith.constant 0.000000e+00 : f32
    %237 = vector.broadcast %cst_83 : f32 to vector<8x128xf32>
    %238 = arith.maximumf %236, %237 : vector<8x128xf32>
    %c7_i32 = arith.constant 7 : i32
    %239 = arith.index_cast %c7_i32 : i32 to index
    %c0_84 = arith.constant 0 : index
    %c0_85 = arith.constant 0 : index
    %240 = vector.load %arg1[%239, %c0_84, %c0_85] : memref<8x128x128xbf16, #tpu.memory_space<vmem>>, vector<1x128x128xbf16>
    %241 = vector.shape_cast %240 : vector<1x128x128xbf16> to vector<128x128xbf16>
    %242 = arith.index_cast %c7_i32 : i32 to index
    %c0_86 = arith.constant 0 : index
    %243 = vector.load %arg2[%242, %c0_86] : memref<8x128xf32, #tpu.memory_space<vmem>>, vector<1x128xf32>
    %244 = arith.index_cast %c7_i32 : i32 to index
    %c0_87 = arith.constant 0 : index
    %245 = vector.load %arg3[%244, %c0_87] : memref<8x128xf32, #tpu.memory_space<vmem>>, vector<1x128xf32>
    %246 = arith.truncf %238 : vector<8x128xf32> to vector<8x128xbf16>
    %cst_88 = arith.constant dense<0.000000e+00> : vector<8x128xf32>
    %247 = tpu.matmul %246, %241, %cst_88 {dimension_numbers = #tpu.dot_dimension_numbers<[1], [0], [0], [1], [0, 0, 1, 1], [], []>} : vector<8x128xbf16>, vector<128x128xbf16>, vector<8x128xf32> -> vector<8x128xf32>
    %cst_89 = arith.constant dense<0.000000e+00> : vector<128xf32>
    %248 = vector.multi_reduction <add>, %247, %cst_89 [0] : vector<8x128xf32> to vector<128xf32>
    %249 = vector.shape_cast %248 : vector<128xf32> to vector<1x128xf32>
    %cst_90 = arith.constant 1.250000e-01 : f32
    %250 = vector.broadcast %cst_90 : f32 to vector<1x128xf32>
    %251 = arith.mulf %249, %250 : vector<1x128xf32>
    %252 = arith.mulf %247, %247 : vector<8x128xf32>
    %cst_91 = arith.constant dense<0.000000e+00> : vector<128xf32>
    %253 = vector.multi_reduction <add>, %252, %cst_91 [0] : vector<8x128xf32> to vector<128xf32>
    %254 = vector.shape_cast %253 : vector<128xf32> to vector<1x128xf32>
    %cst_92 = arith.constant 1.250000e-01 : f32
    %255 = vector.broadcast %cst_92 : f32 to vector<1x128xf32>
    %256 = arith.mulf %254, %255 : vector<1x128xf32>
    %257 = arith.mulf %251, %251 : vector<1x128xf32>
    %258 = arith.subf %256, %257 : vector<1x128xf32>
    %cst_93 = arith.constant 0.000000e+00 : f32
    %259 = vector.broadcast %cst_93 : f32 to vector<1x128xf32>
    %260 = arith.maximumf %258, %259 : vector<1x128xf32>
    %cst_94 = arith.constant 9.99999974E-6 : f32
    %261 = vector.broadcast %cst_94 : f32 to vector<1x128xf32>
    %262 = arith.addf %260, %261 : vector<1x128xf32>
    %263 = math.rsqrt %262 : vector<1x128xf32>
    %264 = arith.mulf %243, %263 : vector<1x128xf32>
    %265 = arith.mulf %251, %264 : vector<1x128xf32>
    %266 = arith.subf %245, %265 : vector<1x128xf32>
    %267 = vector.broadcast %264 : vector<1x128xf32> to vector<8x128xf32>
    %268 = arith.mulf %247, %267 : vector<8x128xf32>
    %269 = vector.broadcast %266 : vector<1x128xf32> to vector<8x128xf32>
    %270 = arith.addf %268, %269 : vector<8x128xf32>
    %cst_95 = arith.constant 0.000000e+00 : f32
    %271 = vector.broadcast %cst_95 : f32 to vector<8x128xf32>
    %272 = arith.maximumf %270, %271 : vector<8x128xf32>
    %c8_i32 = arith.constant 8 : i32
    %c0_96 = arith.constant 0 : index
    %c0_97 = arith.constant 0 : index
    %273 = vector.load %arg4[%c0_96, %c0_97] : memref<8x128xf32, #tpu.memory_space<vmem>>, vector<8x128xf32>
    tpu.vector_store %arg4[%c0_96, %c0_97], %272 {strides = array<i32>} : memref<8x128xf32, #tpu.memory_space<vmem>>, vector<8x128xf32>,
    return
  }
}

</mosaic_0001>

<llo_original>
// kernel: tpu_custom_call.1
$region0: #{tpu_custom_call.1}
  #allocation0 [shape = 'u32[]', space=smem, size = 0x4, offset = 0x4, fixed_abs, tag = 'smem constant byte address 0x4 - core index']
  #allocation1 [shape = 'u32[144,128]{1,0:T(1,128)}', space=vmem, size = 0x12000, scoped, tag = 'internal scratch']
  %s0 = inlined_call_operand.hbm [shape: f32[8,128], index: 0, kind: input, shape index: {}]
  %s1 = inlined_call_operand.hbm [shape: bf16[8,128,128], index: 1, kind: input, shape index: {}]
  %s2 = inlined_call_operand.hbm [shape: f32[8,128], index: 2, kind: input, shape index: {}]
  %s3 = inlined_call_operand.vmem [shape: f32[8,128], index: 3, kind: input, shape index: {}]
  %s4 = inlined_call_operand.hbm [shape: f32[8,128], index: 4, kind: output, shape index: {}]
  %s5 = sld [smem:[#allocation0]]
  $region38: #{tpu_custom_call.1} parent=0
    _
  %s7 = ssub.s32 1, %s5
  %s8 = scalar_select 0, %s7, %s5
  $region1: #{tpu_custom_call.1} parent=0
    #allocation2 [shape = 'u8[4096]{0}', space=vmem, size = 0x1000, scoped, tag = 'input window, operand 0, single buffered']
    #allocation3 [shape = 's32[1]{0}', space=sflag, size = 0x4, scoped, tag = 'scoped memory for tpu_custom_call.1']
    #allocation4 [shape = 's32[1]{0}', space=sflag, size = 0x4, scoped, tag = 'scoped memory for tpu_custom_call.1']
    #allocation5 [shape = 'u8[262144]{0}', space=vmem, size = 0x40000, scoped, tag = 'input window, operand 1, single buffered']
    #allocation6 [shape = 's32[1]{0}', space=sflag, size = 0x4, scoped, tag = 'scoped memory for tpu_custom_call.1']
    #allocation7 [shape = 'u8[4096]{0}', space=vmem, size = 0x1000, scoped, tag = 'input window, operand 2, single buffered']
    #allocation8 [shape = 'u8[4096]{0}', space=vmem, size = 0x1000, scoped, tag = 'output window, operand 0, single buffered']
    %9 = vsyncpa [#allocation3], 0
    %10 = vsyncpa [#allocation6], 0
    %11 = vsyncpa [#allocation4], 0
    // Predicated region
    $region2: #{tpu_custom_call.1} parent=1 // pred_check
      _
    $region3: #{tpu_custom_call.1} parent=1 // pred_check_branch
      %13 = sbr.rel (0) target = $region5
    $region4: #{tpu_custom_call.1} parent=1 // pred_region
      %s15 = ssub.s32 128, 128
      %16 = vsyncadd [#allocation3], %s15
      %s18 = sshll.u32 [#allocation2], 4
      %s19 = int_to_ptr.vmem [resolvable:$true] %s18
      %21 = dma.hbm_to_vmem [thread:$0]  %s0, 128, %s19, [#allocation3]
    $region5: #{tpu_custom_call.1} parent=1 // pred_fallthru
      _
    // Predicated region
    $region6: #{tpu_custom_call.1} parent=1 // pred_check
      _
    $region7: #{tpu_custom_call.1} parent=1 // pred_check_branch
      %23 = sbr.rel (0) target = $region9
    $region8: #{tpu_custom_call.1} parent=1 // pred_region
      %s25 = ssub.s32 8192, 8192
      %26 = vsyncadd [#allocation6], %s25
      %s27 = sshll.u32 [#allocation5], 4
      %s28 = int_to_ptr.vmem [resolvable:$true] %s27
      %33 = dma.hbm_to_vmem [thread:$0]  %s1, 8192, %s28, [#allocation6], 64, 64, 4
    $region9: #{tpu_custom_call.1} parent=1 // pred_fallthru
      _
    // Predicated region
    $region10: #{tpu_custom_call.1} parent=1 // pred_check
      _
    $region11: #{tpu_custom_call.1} parent=1 // pred_check_branch
      %35 = sbr.rel (0) target = $region13
    $region12: #{tpu_custom_call.1} parent=1 // pred_region
      %s37 = ssub.s32 128, 128
      %38 = vsyncadd [#allocation6], %s37
      %s40 = sshll.u32 [#allocation7], 4
      %s41 = int_to_ptr.vmem [resolvable:$true] %s40
      %43 = dma.hbm_to_vmem [thread:$0]  %s2, 128, %s41, [#allocation6]
    $region13: #{tpu_custom_call.1} parent=1 // pred_fallthru
      _
    // Predicated region
    $region14: #{tpu_custom_call.1} parent=1 // pred_check
      _
    $region15: #{tpu_custom_call.1} parent=1 // pred_check_branch
      %45 = sbr.rel (0) target = $region17
    $region16: #{tpu_custom_call.1} parent=1 // pred_region
      _
    $region17: #{tpu_custom_call.1} parent=1 // pred_fallthru
      _
    // Predicated region
    $region18: #{tpu_custom_call.1} parent=1 // pred_check
      _
    $region19: #{tpu_custom_call.1} parent=1 // pred_check_branch
      %47 = sbr.rel (0) target = $region21
    $region20: #{tpu_custom_call.1} parent=1 // pred_region
      %48 = dma.done [#allocation3], 128
    $region21: #{tpu_custom_call.1} parent=1 // pred_fallthru
      _
    // Predicated region
    $region22: #{tpu_custom_call.1} parent=1 // pred_check
      _
    $region23: #{tpu_custom_call.1} parent=1 // pred_check_branch
      %50 = sbr.rel (0) target = $region25
    $region24: #{tpu_custom_call.1} parent=1 // pred_region
      %51 = dma.done [#allocation6], 8192
    $region25: #{tpu_custom_call.1} parent=1 // pred_fallthru
      _
    // Predicated region
    $region26: #{tpu_custom_call.1} parent=1 // pred_check
      _
    $region27: #{tpu_custom_call.1} parent=1 // pred_check_branch
      %53 = sbr.rel (0) target = $region29
    $region28: #{tpu_custom_call.1} parent=1 // pred_region
      %54 = dma.done [#allocation6], 128
    $region29: #{tpu_custom_call.1} parent=1 // pred_fallthru
      _
    %v56 = vld [vmem:[#allocation2] sm:$0xff]
    %v57 = vld [vmem:[#allocation5] sm:$0xf]
    %v58 = vld [vmem:[#allocation5 + $0x4] sm:$0xf]
    %v59 = vld [vmem:[#allocation5 + $0x8] sm:$0xf]
    %v60 = vld [vmem:[#allocation5 + $0xc] sm:$0xf]
    %v61 = vld [vmem:[#allocation5 + $0x10] sm:$0xf]
    %v62 = vld [vmem:[#allocation5 + $0x14] sm:$0xf]
    %v63 = vld [vmem:[#allocation5 + $0x18] sm:$0xf]
    %v64 = vld [vmem:[#allocation5 + $0x1c] sm:$0xf]
    %v65 = vld [vmem:[#allocation5 + $0x20] sm:$0xf]
    %v66 = vld [vmem:[#allocation5 + $0x24] sm:$0xf]
    %v67 = vld [vmem:[#allocation5 + $0x28] sm:$0xf]
    %v68 = vld [vmem:[#allocation5 + $0x2c] sm:$0xf]
    %v69 = vld [vmem:[#allocation5 + $0x30] sm:$0xf]
    %v70 = vld [vmem:[#allocation5 + $0x34] sm:$0xf]
    %v71 = vld [vmem:[#allocation5 + $0x38] sm:$0xf]
    %v72 = vld [vmem:[#allocation5 + $0x3c] sm:$0xf]
    %v73 = vld [vmem:[#allocation7] sm:$0x1]
    %v74 = vld [vmem:[%s3] sm:$0x1]
    %v75 = vpack.c.bf16 %v56, %v56
    %v92 = vunpack.c.l.b16 %v57
    %v93 = vunpack.c.l.b16 %v58
    %v94 = vunpack.c.l.b16 %v59
    %v95 = vunpack.c.l.b16 %v60
    %v96 = vunpack.c.l.b16 %v61
    %v97 = vunpack.c.l.b16 %v62
    %v98 = vunpack.c.l.b16 %v63
    %v99 = vunpack.c.l.b16 %v64
    %v100 = vunpack.c.l.b16 %v65
    %v101 = vunpack.c.l.b16 %v66
    %v102 = vunpack.c.l.b16 %v67
    %v103 = vunpack.c.l.b16 %v68
    %v104 = vunpack.c.l.b16 %v69
    %v105 = vunpack.c.l.b16 %v70
    %v106 = vunpack.c.l.b16 %v71
    %v107 = vunpack.c.l.b16 %v72
    %v108 = vpack.c.b16 %v93, %v92
    %v109 = vpack.c.b16 %v95, %v94
    %v110 = vpack.c.b16 %v97, %v96
    %v111 = vpack.c.b16 %v99, %v98
    %v112 = vpack.c.b16 %v101, %v100
    %v113 = vpack.c.b16 %v103, %v102
    %v114 = vpack.c.b16 %v105, %v104
    %v115 = vpack.c.b16 %v107, %v106
    %124 = vmatprep.subr.bf16.mxu0 0
    %125 = vmatpush1.bf16.msra.mxu0 %v108
    %126 = vmatprep.subr.bf16.mxu0 0
    %127 = vmatpush1.bf16.msra.mxu0 %v109
    %128 = vmatprep.subr.bf16.mxu0 0
    %129 = vmatpush1.bf16.msra.mxu0 %v110
    %130 = vmatprep.subr.bf16.mxu0 0
    %131 = vmatpush1.bf16.msra.mxu0 %v111
    %132 = vmatprep.subr.bf16.mxu0 0
    %133 = vmatpush1.bf16.msra.mxu0 %v112
    %134 = vmatprep.subr.bf16.mxu0 0
    %135 = vmatpush1.bf16.msra.mxu0 %v113
    %136 = vmatprep.subr.bf16.mxu0 0
    %137 = vmatpush1.bf16.msra.mxu0 %v114
    %138 = vmatprep.subr.bf16.mxu0 0
    %139 = vmatpush1.bf16.msra.mxu0 %v115
    %140 = vmatprep.subr.bf16.mxu0 0
    %141 = vmatpush1.bf16.msra.mxu0 0
    %142 = vmatprep.subr.bf16.mxu0 0
    %143 = vmatpush1.bf16.msra.mxu0 0
    %144 = vmatprep.subr.bf16.mxu0 0
    %145 = vmatpush1.bf16.msra.mxu0 0
    %146 = vmatprep.subr.bf16.mxu0 0
    %147 = vmatpush1.bf16.msra.mxu0 0
    %148 = vmatprep.subr.bf16.mxu0 0
    %149 = vmatpush1.bf16.msra.mxu0 0
    %150 = vmatprep.subr.bf16.mxu0 0
    %151 = vmatpush1.bf16.msra.mxu0 0
    %152 = vmatprep.subr.bf16.mxu0 0
    %153 = vmatpush1.bf16.msra.mxu0 0
    %154 = vmatprep.subr.bf16.mxu0 0
    %155 = vmatpush1.bf16.msra.mxu0 0
    %156 = vmatprep.mubr.bf16.mxu0 0
    %157 = vmatmul.mubr.bf16.gmra.mrb[0].mxu0 %v75
    %v158 = vpop.f32.mrb[0].mxu0
    %v159 = vadd.f32 0.0, %v158
    %v160 = vpop.f32.mrb[0].mxu0
    %v161 = vpop.f32.mrb[0].mxu0
    %v162 = vpop.f32.mrb[0].mxu0
    %163 = vdwg.mxu0
    %v164 = vrot.slane %v159, 4
    %v165 = vadd.f32 %v159, %v164
    %v166 = vrot.slane %v165, 2
    %v167 = vadd.f32 %v165, %v166
    %v168 = vrot.slane %v167, 1
    %v169 = vadd.f32 %v167, %v168
    %v170 = vmul.f32 %v169, 0.125
    %v171 = vmul.f32 %v159, %v159
    %v172 = vrot.slane %v171, 4
    %v173 = vadd.f32 %v171, %v172
    %v174 = vrot.slane %v173, 2
    %v175 = vadd.f32 %v173, %v174
    %v176 = vrot.slane %v175, 1
    %v177 = vadd.f32 %v175, %v176
    %v178 = vmul.f32 %v177, 0.125
    %v179 = vmul.f32 %v170, %v170
    %v180 = vsub.f32 %v178, %v179
    %v181 = vmax.f32 %v180, 0.0
    %v182 = vadd.f32 %v181, 1e-05
    %v183 = vrsqrt.pop %v182
    %v184 = vmul.f32 %v73, %v183
    %v185 = vmul.f32 %v170, %v184
    %v186 = vsub.f32 %v74, %v185
    %v187 = vlaneseq
    %v188 = vshrl.u32 %v187, 7
    %v189 = vsub.s32 0, %v188
    %v190 = vrot.slane %v184, %v189
    %v191 = vmul.f32 %v159, %v190
    %v192 = vlaneseq
    %v193 = vshrl.u32 %v192, 7
    %v194 = vsub.s32 0, %v193
    %v195 = vrot.slane %v186, %v194
    %v196 = vadd.f32 %v191, %v195
    %v197 = vmax.f32 %v196, 0.0
    %s198 = scalar_lea.vmem [#allocation5], 64
    %v199 = vld [vmem:[%s198] sm:$0xf]
    %v200 = vld [vmem:[%s198 + $0x4] sm:$0xf]
    %v201 = vld [vmem:[%s198 + $0x8] sm:$0xf]
    %v202 = vld [vmem:[%s198 + $0xc] sm:$0xf]
    %v203 = vld [vmem:[%s198 + $0x10] sm:$0xf]
    %v204 = vld [vmem:[%s198 + $0x14] sm:$0xf]
    %v205 = vld [vmem:[%s198 + $0x18] sm:$0xf]
    %v206 = vld [vmem:[%s198 + $0x1c] sm:$0xf]
    %v207 = vld [vmem:[%s198 + $0x20] sm:$0xf]
    %v208 = vld [vmem:[%s198 + $0x24] sm:$0xf]
    %v209 = vld [vmem:[%s198 + $0x28] sm:$0xf]
    %v210 = vld [vmem:[%s198 + $0x2c] sm:$0xf]
    %v211 = vld [vmem:[%s198 + $0x30] sm:$0xf]
    %v212 = vld [vmem:[%s198 + $0x34] sm:$0xf]
    %v213 = vld [vmem:[%s198 + $0x38] sm:$0xf]
    %v214 = vld [vmem:[%s198 + $0x3c] sm:$0xf]
    %v215 = vld [vmem:[#allocation7 + $0x1] sm:$0x1]
    %v216 = vld [vmem:[%s3 + $0x1] sm:$0x1]
    %v217 = vpack.c.bf16 %v197, %v197
    %v234 = vunpack.c.l.b16 %v199
    %v235 = vunpack.c.l.b16 %v200
    %v236 = vunpack.c.l.b16 %v201
    %v237 = vunpack.c.l.b16 %v202
    %v238 = vunpack.c.l.b16 %v203
    %v239 = vunpack.c.l.b16 %v204
    %v240 = vunpack.c.l.b16 %v205
    %v241 = vunpack.c.l.b16 %v206
    %v242 = vunpack.c.l.b16 %v207
    %v243 = vunpack.c.l.b16 %v208
    %v244 = vunpack.c.l.b16 %v209
    %v245 = vunpack.c.l.b16 %v210
    %v246 = vunpack.c.l.b16 %v211
    %v247 = vunpack.c.l.b16 %v212
    %v248 = vunpack.c.l.b16 %v213
    %v249 = vunpack.c.l.b16 %v214
    %v250 = vpack.c.b16 %v235, %v234
    %v251 = vpack.c.b16 %v237, %v236
    %v252 = vpack.c.b16 %v239, %v238
    %v253 = vpack.c.b16 %v241, %v240
    %v254 = vpack.c.b16 %v243, %v242
    %v255 = vpack.c.b16 %v245, %v244
    %v256 = vpack.c.b16 %v247, %v246
    %v257 = vpack.c.b16 %v249, %v248
    %266 = vmatprep.subr.bf16.mxu0 0
    %267 = vmatpush1.bf16.msra.mxu0 %v250
    %268 = vmatprep.subr.bf16.mxu0 0
    %269 = vmatpush1.bf16.msra.mxu0 %v251
    %270 = vmatprep.subr.bf16.mxu0 0
    %271 = vmatpush1.bf16.msra.mxu0 %v252
    %272 = vmatprep.subr.bf16.mxu0 0
    %273 = vmatpush1.bf16.msra.mxu0 %v253
    %274 = vmatprep.subr.bf16.mxu0 0
    %275 = vmatpush1.bf16.msra.mxu0 %v254
    %276 = vmatprep.subr.bf16.mxu0 0
    %277 = vmatpush1.bf16.msra.mxu0 %v255
    %278 = vmatprep.subr.bf16.mxu0 0
    %279 = vmatpush1.bf16.msra.mxu0 %v256
    %280 = vmatprep.subr.bf16.mxu0 0
    %281 = vmatpush1.bf16.msra.mxu0 %v257
    %282 = vmatprep.subr.bf16.mxu0 0
    %283 = vmatpush1.bf16.msra.mxu0 0
    %284 = vmatprep.subr.bf16.mxu0 0
    %285 = vmatpush1.bf16.msra.mxu0 0
    %286 = vmatprep.subr.bf16.mxu0 0
    %287 = vmatpush1.bf16.msra.mxu0 0
    %288 = vmatprep.subr.bf16.mxu0 0
    %289 = vmatpush1.bf16.msra.mxu0 0
    %290 = vmatprep.subr.bf16.mxu0 0
    %291 = vmatpush1.bf16.msra.mxu0 0
    %292 = vmatprep.subr.bf16.mxu0 0
    %293 = vmatpush1.bf16.msra.mxu0 0
    %294 = vmatprep.subr.bf16.mxu0 0
    %295 = vmatpush1.bf16.msra.mxu0 0
    %296 = vmatprep.subr.bf16.mxu0 0
    %297 = vmatpush1.bf16.msra.mxu0 0
    %298 = vmatprep.mubr.bf16.mxu0 0
    %299 = vmatmul.mubr.bf16.gmra.mrb[0].mxu0 %v217
    %v300 = vpop.f32.mrb[0].mxu0
    %v301 = vadd.f32 0.0, %v300
    %v302 = vpop.f32.mrb[0].mxu0
    %v303 = vpop.f32.mrb[0].mxu0
    %v304 = vpop.f32.mrb[0].mxu0
    %305 = vdwg.mxu0
    %v306 = vrot.slane %v301, 4
    %v307 = vadd.f32 %v301, %v306
    %v308 = vrot.slane %v307, 2
    %v309 = vadd.f32 %v307, %v308
    %v310 = vrot.slane %v309, 1
    %v311 = vadd.f32 %v309, %v310
    %v312 = vmul.f32 %v311, 0.125
    %v313 = vmul.f32 %v301, %v301
    %v314 = vrot.slane %v313, 4
    %v315 = vadd.f32 %v313, %v314
    %v316 = vrot.slane %v315, 2
    %v317 = vadd.f32 %v315, %v316
    %v318 = vrot.slane %v317, 1
    %v319 = vadd.f32 %v317, %v318
    %v320 = vmul.f32 %v319, 0.125
    %v321 = vmul.f32 %v312, %v312
    %v322 = vsub.f32 %v320, %v321
    %v323 = vmax.f32 %v322, 0.0
    %v324 = vadd.f32 %v323, 1e-05
    %v325 = vrsqrt.pop %v324
    %v326 = vmul.f32 %v215, %v325
    %v327 = vmul.f32 %v312, %v326
    %v328 = vsub.f32 %v216, %v327
    %v329 = vlaneseq
    %v330 = vshrl.u32 %v329, 7
    %v331 = vsub.s32 0, %v330
    %v332 = vrot.slane %v326, %v331
    %v333 = vmul.f32 %v301, %v332
    %v334 = vlaneseq
    %v335 = vshrl.u32 %v334, 7
    %v336 = vsub.s32 0, %v335
    %v337 = vrot.slane %v328, %v336
    %v338 = vadd.f32 %v333, %v337
    %v339 = vmax.f32 %v338, 0.0
    %s340 = scalar_lea.vmem [#allocation5], 128
    %v341 = vld [vmem:[%s340] sm:$0xf]
    %v342 = vld [vmem:[%s340 + $0x4] sm:$0xf]
    %v343 = vld [vmem:[%s340 + $0x8] sm:$0xf]
    %v344 = vld [vmem:[%s340 + $0xc] sm:$0xf]
    %v345 = vld [vmem:[%s340 + $0x10] sm:$0xf]
    %v346 = vld [vmem:[%s340 + $0x14] sm:$0xf]
    %v347 = vld [vmem:[%s340 + $0x18] sm:$0xf]
    %v348 = vld [vmem:[%s340 + $0x1c] sm:$0xf]
    %v349 = vld [vmem:[%s340 + $0x20] sm:$0xf]
    %v350 = vld [vmem:[%s340 + $0x24] sm:$0xf]
    %v351 = vld [vmem:[%s340 + $0x28] sm:$0xf]
    %v352 = vld [vmem:[%s340 + $0x2c] sm:$0xf]
    %v353 = vld [vmem:[%s340 + $0x30] sm:$0xf]
    %v354 = vld [vmem:[%s340 + $0x34] sm:$0xf]
    %v355 = vld [vmem:[%s340 + $0x38] sm:$0xf]
    %v356 = vld [vmem:[%s340 + $0x3c] sm:$0xf]
    %v357 = vld [vmem:[#allocation7 + $0x2] sm:$0x1]
    %v358 = vld [vmem:[%s3 + $0x2] sm:$0x1]
    %v359 = vpack.c.bf16 %v339, %v339
    %v376 = vunpack.c.l.b16 %v341
    %v377 = vunpack.c.l.b16 %v342
    %v378 = vunpack.c.l.b16 %v343
    %v379 = vunpack.c.l.b16 %v344
    %v380 = vunpack.c.l.b16 %v345
    %v381 = vunpack.c.l.b16 %v346
    %v382 = vunpack.c.l.b16 %v347
    %v383 = vunpack.c.l.b16 %v348
    %v384 = vunpack.c.l.b16 %v349
    %v385 = vunpack.c.l.b16 %v350
    %v386 = vunpack.c.l.b16 %v351
    %v387 = vunpack.c.l.b16 %v352
    %v388 = vunpack.c.l.b16 %v353
    %v389 = vunpack.c.l.b16 %v354
    %v390 = vunpack.c.l.b16 %v355
    %v391 = vunpack.c.l.b16 %v356
    %v392 = vpack.c.b16 %v377, %v376
    %v393 = vpack.c.b16 %v379, %v378
    %v394 = vpack.c.b16 %v381, %v380
    %v395 = vpack.c.b16 %v383, %v382
    %v396 = vpack.c.b16 %v385, %v384
    %v397 = vpack.c.b16 %v387, %v386
    %v398 = vpack.c.b16 %v389, %v388
    %v399 = vpack.c.b16 %v391, %v390
    %408 = vmatprep.subr.bf16.mxu0 0
    %409 = vmatpush1.bf16.msra.mxu0 %v392
    %410 = vmatprep.subr.bf16.mxu0 0
    %411 = vmatpush1.bf16.msra.mxu0 %v393
    %412 = vmatprep.subr.bf16.mxu0 0
    %413 = vmatpush1.bf16.msra.mxu0 %v394
    %414 = vmatprep.subr.bf16.mxu0 0
    %415 = vmatpush1.bf16.msra.mxu0 %v395
    %416 = vmatprep.subr.bf16.mxu0 0
    %417 = vmatpush1.bf16.msra.mxu0 %v396
    %418 = vmatprep.subr.bf16.mxu0 0
    %419 = vmatpush1.bf16.msra.mxu0 %v397
    %420 = vmatprep.subr.bf16.mxu0 0
    %421 = vmatpush1.bf16.msra.mxu0 %v398
    %422 = vmatprep.subr.bf16.mxu0 0
    %423 = vmatpush1.bf16.msra.mxu0 %v399
    %424 = vmatprep.subr.bf16.mxu0 0
    %425 = vmatpush1.bf16.msra.mxu0 0
    %426 = vmatprep.subr.bf16.mxu0 0
    %427 = vmatpush1.bf16.msra.mxu0 0
    %428 = vmatprep.subr.bf16.mxu0 0
    %429 = vmatpush1.bf16.msra.mxu0 0
    %430 = vmatprep.subr.bf16.mxu0 0
    %431 = vmatpush1.bf16.msra.mxu0 0
    %432 = vmatprep.subr.bf16.mxu0 0
    %433 = vmatpush1.bf16.msra.mxu0 0
    %434 = vmatprep.subr.bf16.mxu0 0
    %435 = vmatpush1.bf16.msra.mxu0 0
    %436 = vmatprep.subr.bf16.mxu0 0
    %437 = vmatpush1.bf16.msra.mxu0 0
    %438 = vmatprep.subr.bf16.mxu0 0
    %439 = vmatpush1.bf16.msra.mxu0 0
    %440 = vmatprep.mubr.bf16.mxu0 0
    %441 = vmatmul.mubr.bf16.gmra.mrb[0].mxu0 %v359
    %v442 = vpop.f32.mrb[0].mxu0
    %v443 = vadd.f32 0.0, %v442
    %v444 = vpop.f32.mrb[0].mxu0
    %v445 = vpop.f32.mrb[0].mxu0
    %v446 = vpop.f32.mrb[0].mxu0
    %447 = vdwg.mxu0
    %v448 = vrot.slane %v443, 4
    %v449 = vadd.f32 %v443, %v448
    %v450 = vrot.slane %v449, 2
    %v451 = vadd.f32 %v449, %v450
    %v452 = vrot.slane %v451, 1
    %v453 = vadd.f32 %v451, %v452
    %v454 = vmul.f32 %v453, 0.125
    %v455 = vmul.f32 %v443, %v443
    %v456 = vrot.slane %v455, 4
    %v457 = vadd.f32 %v455, %v456
    %v458 = vrot.slane %v457, 2
    %v459 = vadd.f32 %v457, %v458
    %v460 = vrot.slane %v459, 1
    %v461 = vadd.f32 %v459, %v460
    %v462 = vmul.f32 %v461, 0.125
    %v463 = vmul.f32 %v454, %v454
    %v464 = vsub.f32 %v462, %v463
    %v465 = vmax.f32 %v464, 0.0
    %v466 = vadd.f32 %v465, 1e-05
    %v467 = vrsqrt.pop %v466
    %v468 = vmul.f32 %v357, %v467
    %v469 = vmul.f32 %v454, %v468
    %v470 = vsub.f32 %v358, %v469
    %v471 = vlaneseq
    %v472 = vshrl.u32 %v471, 7
    %v473 = vsub.s32 0, %v472
    %v474 = vrot.slane %v468, %v473
    %v475 = vmul.f32 %v443, %v474
    %v476 = vlaneseq
    %v477 = vshrl.u32 %v476, 7
    %v478 = vsub.s32 0, %v477
    %v479 = vrot.slane %v470, %v478
    %v480 = vadd.f32 %v475, %v479
    %v481 = vmax.f32 %v480, 0.0
    %s482 = scalar_lea.vmem [#allocation5], 192
    %v483 = vld [vmem:[%s482] sm:$0xf]
    %v484 = vld [vmem:[%s482 + $0x4] sm:$0xf]
    %v485 = vld [vmem:[%s482 + $0x8] sm:$0xf]
    %v486 = vld [vmem:[%s482 + $0xc] sm:$0xf]
    %v487 = vld [vmem:[%s482 + $0x10] sm:$0xf]
    %v488 = vld [vmem:[%s482 + $0x14] sm:$0xf]
    %v489 = vld [vmem:[%s482 + $0x18] sm:$0xf]
    %v490 = vld [vmem:[%s482 + $0x1c] sm:$0xf]
    %v491 = vld [vmem:[%s482 + $0x20] sm:$0xf]
    %v492 = vld [vmem:[%s482 + $0x24] sm:$0xf]
    %v493 = vld [vmem:[%s482 + $0x28] sm:$0xf]
    %v494 = vld [vmem:[%s482 + $0x2c] sm:$0xf]
    %v495 = vld [vmem:[%s482 + $0x30] sm:$0xf]
    %v496 = vld [vmem:[%s482 + $0x34] sm:$0xf]
    %v497 = vld [vmem:[%s482 + $0x38] sm:$0xf]
    %v498 = vld [vmem:[%s482 + $0x3c] sm:$0xf]
    %v499 = vld [vmem:[#allocation7 + $0x3] sm:$0x1]
    %v500 = vld [vmem:[%s3 + $0x3] sm:$0x1]
    %v501 = vpack.c.bf16 %v481, %v481
    %v518 = vunpack.c.l.b16 %v483
    %v519 = vunpack.c.l.b16 %v484
    %v520 = vunpack.c.l.b16 %v485
    %v521 = vunpack.c.l.b16 %v486
    %v522 = vunpack.c.l.b16 %v487
    %v523 = vunpack.c.l.b16 %v488
    %v524 = vunpack.c.l.b16 %v489
    %v525 = vunpack.c.l.b16 %v490
    %v526 = vunpack.c.l.b16 %v491
    %v527 = vunpack.c.l.b16 %v492
    %v528 = vunpack.c.l.b16 %v493
    %v529 = vunpack.c.l.b16 %v494
    %v530 = vunpack.c.l.b16 %v495
    %v531 = vunpack.c.l.b16 %v496
    %v532 = vunpack.c.l.b16 %v497
    %v533 = vunpack.c.l.b16 %v498
    %v534 = vpack.c.b16 %v519, %v518
    %v535 = vpack.c.b16 %v521, %v520
    %v536 = vpack.c.b16 %v523, %v522
    %v537 = vpack.c.b16 %v525, %v524
    %v538 = vpack.c.b16 %v527, %v526
    %v539 = vpack.c.b16 %v529, %v528
    %v540 = vpack.c.b16 %v531, %v530
    %v541 = vpack.c.b16 %v533, %v532
    %550 = vmatprep.subr.bf16.mxu0 0
    %551 = vmatpush1.bf16.msra.mxu0 %v534
    %552 = vmatprep.subr.bf16.mxu0 0
    %553 = vmatpush1.bf16.msra.mxu0 %v535
    %554 = vmatprep.subr.bf16.mxu0 0
    %555 = vmatpush1.bf16.msra.mxu0 %v536
    %556 = vmatprep.subr.bf16.mxu0 0
    %557 = vmatpush1.bf16.msra.mxu0 %v537
    %558 = vmatprep.subr.bf16.mxu0 0
    %559 = vmatpush1.bf16.msra.mxu0 %v538
    %560 = vmatprep.subr.bf16.mxu0 0
    %561 = vmatpush1.bf16.msra.mxu0 %v539
    %562 = vmatprep.subr.bf16.mxu0 0
    %563 = vmatpush1.bf16.msra.mxu0 %v540
    %564 = vmatprep.subr.bf16.mxu0 0
    %565 = vmatpush1.bf16.msra.mxu0 %v541
    %566 = vmatprep.subr.bf16.mxu0 0
    %567 = vmatpush1.bf16.msra.mxu0 0
    %568 = vmatprep.subr.bf16.mxu0 0
    %569 = vmatpush1.bf16.msra.mxu0 0
    %570 = vmatprep.subr.bf16.mxu0 0
    %571 = vmatpush1.bf16.msra.mxu0 0
    %572 = vmatprep.subr.bf16.mxu0 0
    %573 = vmatpush1.bf16.msra.mxu0 0
    %574 = vmatprep.subr.bf16.mxu0 0
    %575 = vmatpush1.bf16.msra.mxu0 0
    %576 = vmatprep.subr.bf16.mxu0 0
    %577 = vmatpush1.bf16.msra.mxu0 0
    %578 = vmatprep.subr.bf16.mxu0 0
    %579 = vmatpush1.bf16.msra.mxu0 0
    %580 = vmatprep.subr.bf16.mxu0 0
    %581 = vmatpush1.bf16.msra.mxu0 0
    %582 = vmatprep.mubr.bf16.mxu0 0
    %583 = vmatmul.mubr.bf16.gmra.mrb[0].mxu0 %v501
    %v584 = vpop.f32.mrb[0].mxu0
    %v585 = vadd.f32 0.0, %v584
    %v586 = vpop.f32.mrb[0].mxu0
    %v587 = vpop.f32.mrb[0].mxu0
    %v588 = vpop.f32.mrb[0].mxu0
    %589 = vdwg.mxu0
    %v590 = vrot.slane %v585, 4
    %v591 = vadd.f32 %v585, %v590
    %v592 = vrot.slane %v591, 2
    %v593 = vadd.f32 %v591, %v592
    %v594 = vrot.slane %v593, 1
    %v595 = vadd.f32 %v593, %v594
    %v596 = vmul.f32 %v595, 0.125
    %v597 = vmul.f32 %v585, %v585
    %v598 = vrot.slane %v597, 4
    %v599 = vadd.f32 %v597, %v598
    %v600 = vrot.slane %v599, 2
    %v601 = vadd.f32 %v599, %v600
    %v602 = vrot.slane %v601, 1
    %v603 = vadd.f32 %v601, %v602
    %v604 = vmul.f32 %v603, 0.125
    %v605 = vmul.f32 %v596, %v596
    %v606 = vsub.f32 %v604, %v605
    %v607 = vmax.f32 %v606, 0.0
    %v608 = vadd.f32 %v607, 1e-05
    %v609 = vrsqrt.pop %v608
    %v610 = vmul.f32 %v499, %v609
    %v611 = vmul.f32 %v596, %v610
    %v612 = vsub.f32 %v500, %v611
    %v613 = vlaneseq
    %v614 = vshrl.u32 %v613, 7
    %v615 = vsub.s32 0, %v614
    %v616 = vrot.slane %v610, %v615
    %v617 = vmul.f32 %v585, %v616
    %v618 = vlaneseq
    %v619 = vshrl.u32 %v618, 7
    %v620 = vsub.s32 0, %v619
    %v621 = vrot.slane %v612, %v620
    %v622 = vadd.f32 %v617, %v621
    %v623 = vmax.f32 %v622, 0.0
    %s624 = scalar_lea.vmem [#allocation5], 256
    %v625 = vld [vmem:[%s624] sm:$0xf]
    %v626 = vld [vmem:[%s624 + $0x4] sm:$0xf]
    %v627 = vld [vmem:[%s624 + $0x8] sm:$0xf]
    %v628 = vld [vmem:[%s624 + $0xc] sm:$0xf]
    %v629 = vld [vmem:[%s624 + $0x10] sm:$0xf]
    %v630 = vld [vmem:[%s624 + $0x14] sm:$0xf]
    %v631 = vld [vmem:[%s624 + $0x18] sm:$0xf]
    %v632 = vld [vmem:[%s624 + $0x1c] sm:$0xf]
    %v633 = vld [vmem:[%s624 + $0x20] sm:$0xf]
    %v634 = vld [vmem:[%s624 + $0x24] sm:$0xf]
    %v635 = vld [vmem:[%s624 + $0x28] sm:$0xf]
    %v636 = vld [vmem:[%s624 + $0x2c] sm:$0xf]
    %v637 = vld [vmem:[%s624 + $0x30] sm:$0xf]
    %v638 = vld [vmem:[%s624 + $0x34] sm:$0xf]
    %v639 = vld [vmem:[%s624 + $0x38] sm:$0xf]
    %v640 = vld [vmem:[%s624 + $0x3c] sm:$0xf]
    %v641 = vld [vmem:[#allocation7 + $0x4] sm:$0x1]
    %v642 = vld [vmem:[%s3 + $0x4] sm:$0x1]
    %v643 = vpack.c.bf16 %v623, %v623
    %v660 = vunpack.c.l.b16 %v625
    %v661 = vunpack.c.l.b16 %v626
    %v662 = vunpack.c.l.b16 %v627
    %v663 = vunpack.c.l.b16 %v628
    %v664 = vunpack.c.l.b16 %v629
    %v665 = vunpack.c.l.b16 %v630
    %v666 = vunpack.c.l.b16 %v631
    %v667 = vunpack.c.l.b16 %v632
    %v668 = vunpack.c.l.b16 %v633
    %v669 = vunpack.c.l.b16 %v634
    %v670 = vunpack.c.l.b16 %v635
    %v671 = vunpack.c.l.b16 %v636
    %v672 = vunpack.c.l.b16 %v637
    %v673 = vunpack.c.l.b16 %v638
    %v674 = vunpack.c.l.b16 %v639
    %v675 = vunpack.c.l.b16 %v640
    %v676 = vpack.c.b16 %v661, %v660
    %v677 = vpack.c.b16 %v663, %v662
    %v678 = vpack.c.b16 %v665, %v664
    %v679 = vpack.c.b16 %v667, %v666
    %v680 = vpack.c.b16 %v669, %v668
    %v681 = vpack.c.b16 %v671, %v670
    %v682 = vpack.c.b16 %v673, %v672
    %v683 = vpack.c.b16 %v675, %v674
    %692 = vmatprep.subr.bf16.mxu0 0
    %693 = vmatpush1.bf16.msra.mxu0 %v676
    %694 = vmatprep.subr.bf16.mxu0 0
    %695 = vmatpush1.bf16.msra.mxu0 %v677
    %696 = vmatprep.subr.bf16.mxu0 0
    %697 = vmatpush1.bf16.msra.mxu0 %v678
    %698 = vmatprep.subr.bf16.mxu0 0
    %699 = vmatpush1.bf16.msra.mxu0 %v679
    %700 = vmatprep.subr.bf16.mxu0 0
    %701 = vmatpush1.bf16.msra.mxu0 %v680
    %702 = vmatprep.subr.bf16.mxu0 0
    %703 = vmatpush1.bf16.msra.mxu0 %v681
    %704 = vmatprep.subr.bf16.mxu0 0
    %705 = vmatpush1.bf16.msra.mxu0 %v682
    %706 = vmatprep.subr.bf16.mxu0 0
    %707 = vmatpush1.bf16.msra.mxu0 %v683
    %708 = vmatprep.subr.bf16.mxu0 0
    %709 = vmatpush1.bf16.msra.mxu0 0
    %710 = vmatprep.subr.bf16.mxu0 0
    %711 = vmatpush1.bf16.msra.mxu0 0
    %712 = vmatprep.subr.bf16.mxu0 0
    %713 = vmatpush1.bf16.msra.mxu0 0
    %714 = vmatprep.subr.bf16.mxu0 0
    %715 = vmatpush1.bf16.msra.mxu0 0
    %716 = vmatprep.subr.bf16.mxu0 0
    %717 = vmatpush1.bf16.msra.mxu0 0
    %718 = vmatprep.subr.bf16.mxu0 0
    %719 = vmatpush1.bf16.msra.mxu0 0
    %720 = vmatprep.subr.bf16.mxu0 0
    %721 = vmatpush1.bf16.msra.mxu0 0
    %722 = vmatprep.subr.bf16.mxu0 0
    %723 = vmatpush1.bf16.msra.mxu0 0
    %724 = vmatprep.mubr.bf16.mxu0 0
    %725 = vmatmul.mubr.bf16.gmra.mrb[0].mxu0 %v643
    %v726 = vpop.f32.mrb[0].mxu0
    %v727 = vadd.f32 0.0, %v726
    %v728 = vpop.f32.mrb[0].mxu0
    %v729 = vpop.f32.mrb[0].mxu0
    %v730 = vpop.f32.mrb[0].mxu0
    %731 = vdwg.mxu0
    %v732 = vrot.slane %v727, 4
    %v733 = vadd.f32 %v727, %v732
    %v734 = vrot.slane %v733, 2
    %v735 = vadd.f32 %v733, %v734
    %v736 = vrot.slane %v735, 1
    %v737 = vadd.f32 %v735, %v736
    %v738 = vmul.f32 %v737, 0.125
    %v739 = vmul.f32 %v727, %v727
    %v740 = vrot.slane %v739, 4
    %v741 = vadd.f32 %v739, %v740
    %v742 = vrot.slane %v741, 2
    %v743 = vadd.f32 %v741, %v742
    %v744 = vrot.slane %v743, 1
    %v745 = vadd.f32 %v743, %v744
    %v746 = vmul.f32 %v745, 0.125
    %v747 = vmul.f32 %v738, %v738
    %v748 = vsub.f32 %v746, %v747
    %v749 = vmax.f32 %v748, 0.0
    %v750 = vadd.f32 %v749, 1e-05
    %v751 = vrsqrt.pop %v750
    %v752 = vmul.f32 %v641, %v751
    %v753 = vmul.f32 %v738, %v752
    %v754 = vsub.f32 %v642, %v753
    %v755 = vlaneseq
    %v756 = vshrl.u32 %v755, 7
    %v757 = vsub.s32 0, %v756
    %v758 = vrot.slane %v752, %v757
    %v759 = vmul.f32 %v727, %v758
    %v760 = vlaneseq
    %v761 = vshrl.u32 %v760, 7
    %v762 = vsub.s32 0, %v761
    %v763 = vrot.slane %v754, %v762
    %v764 = vadd.f32 %v759, %v763
    %v765 = vmax.f32 %v764, 0.0
    %s766 = scalar_lea.vmem [#allocation5], 320
    %v767 = vld [vmem:[%s766] sm:$0xf]
    %v768 = vld [vmem:[%s766 + $0x4] sm:$0xf]
    %v769 = vld [vmem:[%s766 + $0x8] sm:$0xf]
    %v770 = vld [vmem:[%s766 + $0xc] sm:$0xf]
    %v771 = vld [vmem:[%s766 + $0x10] sm:$0xf]
    %v772 = vld [vmem:[%s766 + $0x14] sm:$0xf]
    %v773 = vld [vmem:[%s766 + $0x18] sm:$0xf]
    %v774 = vld [vmem:[%s766 + $0x1c] sm:$0xf]
    %v775 = vld [vmem:[%s766 + $0x20] sm:$0xf]
    %v776 = vld [vmem:[%s766 + $0x24] sm:$0xf]
    %v777 = vld [vmem:[%s766 + $0x28] sm:$0xf]
    %v778 = vld [vmem:[%s766 + $0x2c] sm:$0xf]
    %v779 = vld [vmem:[%s766 + $0x30] sm:$0xf]
    %v780 = vld [vmem:[%s766 + $0x34] sm:$0xf]
    %v781 = vld [vmem:[%s766 + $0x38] sm:$0xf]
    %v782 = vld [vmem:[%s766 + $0x3c] sm:$0xf]
    %v783 = vld [vmem:[#allocation7 + $0x5] sm:$0x1]
    %v784 = vld [vmem:[%s3 + $0x5] sm:$0x1]
    %v785 = vpack.c.bf16 %v765, %v765
    %v802 = vunpack.c.l.b16 %v767
    %v803 = vunpack.c.l.b16 %v768
    %v804 = vunpack.c.l.b16 %v769
    %v805 = vunpack.c.l.b16 %v770
    %v806 = vunpack.c.l.b16 %v771
    %v807 = vunpack.c.l.b16 %v772
    %v808 = vunpack.c.l.b16 %v773
    %v809 = vunpack.c.l.b16 %v774
    %v810 = vunpack.c.l.b16 %v775
    %v811 = vunpack.c.l.b16 %v776
    %v812 = vunpack.c.l.b16 %v777
    %v813 = vunpack.c.l.b16 %v778
    %v814 = vunpack.c.l.b16 %v779
    %v815 = vunpack.c.l.b16 %v780
    %v816 = vunpack.c.l.b16 %v781
    %v817 = vunpack.c.l.b16 %v782
    %v818 = vpack.c.b16 %v803, %v802
    %v819 = vpack.c.b16 %v805, %v804
    %v820 = vpack.c.b16 %v807, %v806
    %v821 = vpack.c.b16 %v809, %v808
    %v822 = vpack.c.b16 %v811, %v810
    %v823 = vpack.c.b16 %v813, %v812
    %v824 = vpack.c.b16 %v815, %v814
    %v825 = vpack.c.b16 %v817, %v816
    %834 = vmatprep.subr.bf16.mxu0 0
    %835 = vmatpush1.bf16.msra.mxu0 %v818
    %836 = vmatprep.subr.bf16.mxu0 0
    %837 = vmatpush1.bf16.msra.mxu0 %v819
    %838 = vmatprep.subr.bf16.mxu0 0
    %839 = vmatpush1.bf16.msra.mxu0 %v820
    %840 = vmatprep.subr.bf16.mxu0 0
    %841 = vmatpush1.bf16.msra.mxu0 %v821
    %842 = vmatprep.subr.bf16.mxu0 0
    %843 = vmatpush1.bf16.msra.mxu0 %v822
    %844 = vmatprep.subr.bf16.mxu0 0
    %845 = vmatpush1.bf16.msra.mxu0 %v823
    %846 = vmatprep.subr.bf16.mxu0 0
    %847 = vmatpush1.bf16.msra.mxu0 %v824
    %848 = vmatprep.subr.bf16.mxu0 0
    %849 = vmatpush1.bf16.msra.mxu0 %v825
    %850 = vmatprep.subr.bf16.mxu0 0
    %851 = vmatpush1.bf16.msra.mxu0 0
    %852 = vmatprep.subr.bf16.mxu0 0
    %853 = vmatpush1.bf16.msra.mxu0 0
    %854 = vmatprep.subr.bf16.mxu0 0
    %855 = vmatpush1.bf16.msra.mxu0 0
    %856 = vmatprep.subr.bf16.mxu0 0
    %857 = vmatpush1.bf16.msra.mxu0 0
    %858 = vmatprep.subr.bf16.mxu0 0
    %859 = vmatpush1.bf16.msra.mxu0 0
    %860 = vmatprep.subr.bf16.mxu0 0
    %861 = vmatpush1.bf16.msra.mxu0 0
    %862 = vmatprep.subr.bf16.mxu0 0
    %863 = vmatpush1.bf16.msra.mxu0 0
    %864 = vmatprep.subr.bf16.mxu0 0
    %865 = vmatpush1.bf16.msra.mxu0 0
    %866 = vmatprep.mubr.bf16.mxu0 0
    %867 = vmatmul.mubr.bf16.gmra.mrb[0].mxu0 %v785
    %v868 = vpop.f32.mrb[0].mxu0
    %v869 = vadd.f32 0.0, %v868
    %v870 = vpop.f32.mrb[0].mxu0
    %v871 = vpop.f32.mrb[0].mxu0
    %v872 = vpop.f32.mrb[0].mxu0
    %873 = vdwg.mxu0
    %v874 = vrot.slane %v869, 4
    %v875 = vadd.f32 %v869, %v874
    %v876 = vrot.slane %v875, 2
    %v877 = vadd.f32 %v875, %v876
    %v878 = vrot.slane %v877, 1
    %v879 = vadd.f32 %v877, %v878
    %v880 = vmul.f32 %v879, 0.125
    %v881 = vmul.f32 %v869, %v869
    %v882 = vrot.slane %v881, 4
    %v883 = vadd.f32 %v881, %v882
    %v884 = vrot.slane %v883, 2
    %v885 = vadd.f32 %v883, %v884
    %v886 = vrot.slane %v885, 1
    %v887 = vadd.f32 %v885, %v886
    %v888 = vmul.f32 %v887, 0.125
    %v889 = vmul.f32 %v880, %v880
    %v890 = vsub.f32 %v888, %v889
    %v891 = vmax.f32 %v890, 0.0
    %v892 = vadd.f32 %v891, 1e-05
    %v893 = vrsqrt.pop %v892
    %v894 = vmul.f32 %v783, %v893
    %v895 = vmul.f32 %v880, %v894
    %v896 = vsub.f32 %v784, %v895
    %v897 = vlaneseq
    %v898 = vshrl.u32 %v897, 7
    %v899 = vsub.s32 0, %v898
    %v900 = vrot.slane %v894, %v899
    %v901 = vmul.f32 %v869, %v900
    %v902 = vlaneseq
    %v903 = vshrl.u32 %v902, 7
    %v904 = vsub.s32 0, %v903
    %v905 = vrot.slane %v896, %v904
    %v906 = vadd.f32 %v901, %v905
    %v907 = vmax.f32 %v906, 0.0
    %s908 = scalar_lea.vmem [#allocation5], 384
    %v909 = vld [vmem:[%s908] sm:$0xf]
    %v910 = vld [vmem:[%s908 + $0x4] sm:$0xf]
    %v911 = vld [vmem:[%s908 + $0x8] sm:$0xf]
    %v912 = vld [vmem:[%s908 + $0xc] sm:$0xf]
    %v913 = vld [vmem:[%s908 + $0x10] sm:$0xf]
    %v914 = vld [vmem:[%s908 + $0x14] sm:$0xf]
    %v915 = vld [vmem:[%s908 + $0x18] sm:$0xf]
    %v916 = vld [vmem:[%s908 + $0x1c] sm:$0xf]
    %v917 = vld [vmem:[%s908 + $0x20] sm:$0xf]
    %v918 = vld [vmem:[%s908 + $0x24] sm:$0xf]
    %v919 = vld [vmem:[%s908 + $0x28] sm:$0xf]
    %v920 = vld [vmem:[%s908 + $0x2c] sm:$0xf]
    %v921 = vld [vmem:[%s908 + $0x30] sm:$0xf]
    %v922 = vld [vmem:[%s908 + $0x34] sm:$0xf]
    %v923 = vld [vmem:[%s908 + $0x38] sm:$0xf]
    %v924 = vld [vmem:[%s908 + $0x3c] sm:$0xf]
    %v925 = vld [vmem:[#allocation7 + $0x6] sm:$0x1]
    %v926 = vld [vmem:[%s3 + $0x6] sm:$0x1]
    %v927 = vpack.c.bf16 %v907, %v907
    %v944 = vunpack.c.l.b16 %v909
    %v945 = vunpack.c.l.b16 %v910
    %v946 = vunpack.c.l.b16 %v911
    %v947 = vunpack.c.l.b16 %v912
    %v948 = vunpack.c.l.b16 %v913
    %v949 = vunpack.c.l.b16 %v914
    %v950 = vunpack.c.l.b16 %v915
    %v951 = vunpack.c.l.b16 %v916
    %v952 = vunpack.c.l.b16 %v917
    %v953 = vunpack.c.l.b16 %v918
    %v954 = vunpack.c.l.b16 %v919
    %v955 = vunpack.c.l.b16 %v920
    %v956 = vunpack.c.l.b16 %v921
    %v957 = vunpack.c.l.b16 %v922
    %v958 = vunpack.c.l.b16 %v923
    %v959 = vunpack.c.l.b16 %v924
    %v960 = vpack.c.b16 %v945, %v944
    %v961 = vpack.c.b16 %v947, %v946
    %v962 = vpack.c.b16 %v949, %v948
    %v963 = vpack.c.b16 %v951, %v950
    %v964 = vpack.c.b16 %v953, %v952
    %v965 = vpack.c.b16 %v955, %v954
    %v966 = vpack.c.b16 %v957, %v956
    %v967 = vpack.c.b16 %v959, %v958
    %976 = vmatprep.subr.bf16.mxu0 0
    %977 = vmatpush1.bf16.msra.mxu0 %v960
    %978 = vmatprep.subr.bf16.mxu0 0
    %979 = vmatpush1.bf16.msra.mxu0 %v961
    %980 = vmatprep.subr.bf16.mxu0 0
    %981 = vmatpush1.bf16.msra.mxu0 %v962
    %982 = vmatprep.subr.bf16.mxu0 0
    %983 = vmatpush1.bf16.msra.mxu0 %v963
    %984 = vmatprep.subr.bf16.mxu0 0
    %985 = vmatpush1.bf16.msra.mxu0 %v964
    %986 = vmatprep.subr.bf16.mxu0 0
    %987 = vmatpush1.bf16.msra.mxu0 %v965
    %988 = vmatprep.subr.bf16.mxu0 0
    %989 = vmatpush1.bf16.msra.mxu0 %v966
    %990 = vmatprep.subr.bf16.mxu0 0
    %991 = vmatpush1.bf16.msra.mxu0 %v967
    %992 = vmatprep.subr.bf16.mxu0 0
    %993 = vmatpush1.bf16.msra.mxu0 0
    %994 = vmatprep.subr.bf16.mxu0 0
    %995 = vmatpush1.bf16.msra.mxu0 0
    %996 = vmatprep.subr.bf16.mxu0 0
    %997 = vmatpush1.bf16.msra.mxu0 0
    %998 = vmatprep.subr.bf16.mxu0 0
    %999 = vmatpush1.bf16.msra.mxu0 0
    %1000 = vmatprep.subr.bf16.mxu0 0
    %1001 = vmatpush1.bf16.msra.mxu0 0
    %1002 = vmatprep.subr.bf16.mxu0 0
    %1003 = vmatpush1.bf16.msra.mxu0 0
    %1004 = vmatprep.subr.bf16.mxu0 0
    %1005 = vmatpush1.bf16.msra.mxu0 0
    %1006 = vmatprep.subr.bf16.mxu0 0
    %1007 = vmatpush1.bf16.msra.mxu0 0
    %1008 = vmatprep.mubr.bf16.mxu0 0
    %1009 = vmatmul.mubr.bf16.gmra.mrb[0].mxu0 %v927
    %v1010 = vpop.f32.mrb[0].mxu0
    %v1011 = vadd.f32 0.0, %v1010
    %v1012 = vpop.f32.mrb[0].mxu0
    %v1013 = vpop.f32.mrb[0].mxu0
    %v1014 = vpop.f32.mrb[0].mxu0
    %1015 = vdwg.mxu0
    %v1016 = vrot.slane %v1011, 4
    %v1017 = vadd.f32 %v1011, %v1016
    %v1018 = vrot.slane %v1017, 2
    %v1019 = vadd.f32 %v1017, %v1018
    %v1020 = vrot.slane %v1019, 1
    %v1021 = vadd.f32 %v1019, %v1020
    %v1022 = vmul.f32 %v1021, 0.125
    %v1023 = vmul.f32 %v1011, %v1011
    %v1024 = vrot.slane %v1023, 4
    %v1025 = vadd.f32 %v1023, %v1024
    %v1026 = vrot.slane %v1025, 2
    %v1027 = vadd.f32 %v1025, %v1026
    %v1028 = vrot.slane %v1027, 1
    %v1029 = vadd.f32 %v1027, %v1028
    %v1030 = vmul.f32 %v1029, 0.125
    %v1031 = vmul.f32 %v1022, %v1022
    %v1032 = vsub.f32 %v1030, %v1031
    %v1033 = vmax.f32 %v1032, 0.0
    %v1034 = vadd.f32 %v1033, 1e-05
    %v1035 = vrsqrt.pop %v1034
    %v1036 = vmul.f32 %v925, %v1035
    %v1037 = vmul.f32 %v1022, %v1036
    %v1038 = vsub.f32 %v926, %v1037
    %v1039 = vlaneseq
    %v1040 = vshrl.u32 %v1039, 7
    %v1041 = vsub.s32 0, %v1040
    %v1042 = vrot.slane %v1036, %v1041
    %v1043 = vmul.f32 %v1011, %v1042
    %v1044 = vlaneseq
    %v1045 = vshrl.u32 %v1044, 7
    %v1046 = vsub.s32 0, %v1045
    %v1047 = vrot.slane %v1038, %v1046
    %v1048 = vadd.f32 %v1043, %v1047
    %v1049 = vmax.f32 %v1048, 0.0
    %s1050 = scalar_lea.vmem [#allocation5], 448
    %v1051 = vld [vmem:[%s1050] sm:$0xf]
    %v1052 = vld [vmem:[%s1050 + $0x4] sm:$0xf]
    %v1053 = vld [vmem:[%s1050 + $0x8] sm:$0xf]
    %v1054 = vld [vmem:[%s1050 + $0xc] sm:$0xf]
    %v1055 = vld [vmem:[%s1050 + $0x10] sm:$0xf]
    %v1056 = vld [vmem:[%s1050 + $0x14] sm:$0xf]
    %v1057 = vld [vmem:[%s1050 + $0x18] sm:$0xf]
    %v1058 = vld [vmem:[%s1050 + $0x1c] sm:$0xf]
    %v1059 = vld [vmem:[%s1050 + $0x20] sm:$0xf]
    %v1060 = vld [vmem:[%s1050 + $0x24] sm:$0xf]
    %v1061 = vld [vmem:[%s1050 + $0x28] sm:$0xf]
    %v1062 = vld [vmem:[%s1050 + $0x2c] sm:$0xf]
    %v1063 = vld [vmem:[%s1050 + $0x30] sm:$0xf]
    %v1064 = vld [vmem:[%s1050 + $0x34] sm:$0xf]
    %v1065 = vld [vmem:[%s1050 + $0x38] sm:$0xf]
    %v1066 = vld [vmem:[%s1050 + $0x3c] sm:$0xf]
    %v1067 = vld [vmem:[#allocation7 + $0x7] sm:$0x1]
    %v1068 = vld [vmem:[%s3 + $0x7] sm:$0x1]
    %v1069 = vpack.c.bf16 %v1049, %v1049
    %v1086 = vunpack.c.l.b16 %v1051
    %v1087 = vunpack.c.l.b16 %v1052
    %v1088 = vunpack.c.l.b16 %v1053
    %v1089 = vunpack.c.l.b16 %v1054
    %v1090 = vunpack.c.l.b16 %v1055
    %v1091 = vunpack.c.l.b16 %v1056
    %v1092 = vunpack.c.l.b16 %v1057
    %v1093 = vunpack.c.l.b16 %v1058
    %v1094 = vunpack.c.l.b16 %v1059
    %v1095 = vunpack.c.l.b16 %v1060
    %v1096 = vunpack.c.l.b16 %v1061
    %v1097 = vunpack.c.l.b16 %v1062
    %v1098 = vunpack.c.l.b16 %v1063
    %v1099 = vunpack.c.l.b16 %v1064
    %v1100 = vunpack.c.l.b16 %v1065
    %v1101 = vunpack.c.l.b16 %v1066
    %v1102 = vpack.c.b16 %v1087, %v1086
    %v1103 = vpack.c.b16 %v1089, %v1088
    %v1104 = vpack.c.b16 %v1091, %v1090
    %v1105 = vpack.c.b16 %v1093, %v1092
    %v1106 = vpack.c.b16 %v1095, %v1094
    %v1107 = vpack.c.b16 %v1097, %v1096
    %v1108 = vpack.c.b16 %v1099, %v1098
    %v1109 = vpack.c.b16 %v1101, %v1100
    %1118 = vmatprep.subr.bf16.mxu0 0
    %1119 = vmatpush1.bf16.msra.mxu0 %v1102
    %1120 = vmatprep.subr.bf16.mxu0 0
    %1121 = vmatpush1.bf16.msra.mxu0 %v1103
    %1122 = vmatprep.subr.bf16.mxu0 0
    %1123 = vmatpush1.bf16.msra.mxu0 %v1104
    %1124 = vmatprep.subr.bf16.mxu0 0
    %1125 = vmatpush1.bf16.msra.mxu0 %v1105
    %1126 = vmatprep.subr.bf16.mxu0 0
    %1127 = vmatpush1.bf16.msra.mxu0 %v1106
    %1128 = vmatprep.subr.bf16.mxu0 0
    %1129 = vmatpush1.bf16.msra.mxu0 %v1107
    %1130 = vmatprep.subr.bf16.mxu0 0
    %1131 = vmatpush1.bf16.msra.mxu0 %v1108
    %1132 = vmatprep.subr.bf16.mxu0 0
    %1133 = vmatpush1.bf16.msra.mxu0 %v1109
    %1134 = vmatprep.subr.bf16.mxu0 0
    %1135 = vmatpush1.bf16.msra.mxu0 0
    %1136 = vmatprep.subr.bf16.mxu0 0
    %1137 = vmatpush1.bf16.msra.mxu0 0
    %1138 = vmatprep.subr.bf16.mxu0 0
    %1139 = vmatpush1.bf16.msra.mxu0 0
    %1140 = vmatprep.subr.bf16.mxu0 0
    %1141 = vmatpush1.bf16.msra.mxu0 0
    %1142 = vmatprep.subr.bf16.mxu0 0
    %1143 = vmatpush1.bf16.msra.mxu0 0
    %1144 = vmatprep.subr.bf16.mxu0 0
    %1145 = vmatpush1.bf16.msra.mxu0 0
    %1146 = vmatprep.subr.bf16.mxu0 0
    %1147 = vmatpush1.bf16.msra.mxu0 0
    %1148 = vmatprep.subr.bf16.mxu0 0
    %1149 = vmatpush1.bf16.msra.mxu0 0
    %1150 = vmatprep.mubr.bf16.mxu0 0
    %1151 = vmatmul.mubr.bf16.gmra.mrb[0].mxu0 %v1069
    %v1152 = vpop.f32.mrb[0].mxu0
    %v1153 = vadd.f32 0.0, %v1152
    %v1154 = vpop.f32.mrb[0].mxu0
    %v1155 = vpop.f32.mrb[0].mxu0
    %v1156 = vpop.f32.mrb[0].mxu0
    %1157 = vdwg.mxu0
    %v1158 = vrot.slane %v1153, 4
    %v1159 = vadd.f32 %v1153, %v1158
    %v1160 = vrot.slane %v1159, 2
    %v1161 = vadd.f32 %v1159, %v1160
    %v1162 = vrot.slane %v1161, 1
    %v1163 = vadd.f32 %v1161, %v1162
    %v1164 = vmul.f32 %v1163, 0.125
    %v1165 = vmul.f32 %v1153, %v1153
    %v1166 = vrot.slane %v1165, 4
    %v1167 = vadd.f32 %v1165, %v1166
    %v1168 = vrot.slane %v1167, 2
    %v1169 = vadd.f32 %v1167, %v1168
    %v1170 = vrot.slane %v1169, 1
    %v1171 = vadd.f32 %v1169, %v1170
    %v1172 = vmul.f32 %v1171, 0.125
    %v1173 = vmul.f32 %v1164, %v1164
    %v1174 = vsub.f32 %v1172, %v1173
    %v1175 = vmax.f32 %v1174, 0.0
    %v1176 = vadd.f32 %v1175, 1e-05
    %v1177 = vrsqrt.pop %v1176
    %v1178 = vmul.f32 %v1067, %v1177
    %v1179 = vmul.f32 %v1164, %v1178
    %v1180 = vsub.f32 %v1068, %v1179
    %v1181 = vlaneseq
    %v1182 = vshrl.u32 %v1181, 7
    %v1183 = vsub.s32 0, %v1182
    %v1184 = vrot.slane %v1178, %v1183
    %v1185 = vmul.f32 %v1153, %v1184
    %v1186 = vlaneseq
    %v1187 = vshrl.u32 %v1186, 7
    %v1188 = vsub.s32 0, %v1187
    %v1189 = vrot.slane %v1180, %v1188
    %v1190 = vadd.f32 %v1185, %v1189
    %v1191 = vmax.f32 %v1190, 0.0
    %1192 = vst [vmem:[#allocation8] sm:$0xff] %v1191
    // Predicated region
    $region30: #{tpu_custom_call.1} parent=1 // pred_check
      _
    $region31: #{tpu_custom_call.1} parent=1 // pred_check_branch
      %1194 = sbr.rel (0) target = $region33
    $region32: #{tpu_custom_call.1} parent=1 // pred_region
      %s1196 = ssub.s32 128, 128
      %1197 = vsyncadd [#allocation4], %s1196
      %s1199 = sshll.u32 [#allocation8], 4
      %s1200 = int_to_ptr.vmem [resolvable:$true] %s1199
      %1202 = dma.vmem_to_hbm [thread:$0]  %s1200, 128, %s4, [#allocation4]
    $region33: #{tpu_custom_call.1} parent=1 // pred_fallthru
      _
    // Predicated region
    $region34: #{tpu_custom_call.1} parent=1 // pred_check
      _
    $region35: #{tpu_custom_call.1} parent=1 // pred_check_branch
      %1204 = sbr.rel (0) target = $region37
    $region36: #{tpu_custom_call.1} parent=1 // pred_region
      %1205 = dma.done [#allocation4], 128
    $region37: #{tpu_custom_call.1} parent=1 // pred_fallthru
      _
    %1206 = vsyncpa [#allocation3], 1
    %1207 = vsyncpa [#allocation6], 1
    %1208 = vsyncpa [#allocation4], 1

</llo_original>
